<compile_context>
chip_gen: v7x
topology: tpu7x:2x2x1
jax: 0.10.0
libtpu: 0.0.40
codegen_flags: <defaults>
</compile_context>

<pallas_src>
import jax
import jax.numpy as jnp
from jax.experimental import pallas as pl
from jax.experimental.pallas import tpu as pltpu

# ----------------------------- configuration -------------------------------
NUM_GRAPHS = 8            # number of micro graphs (= macro-graph nodes)
NODES = 16                # nodes per micro graph (synthetic, uniform size)
GN = NUM_GRAPHS * NODES   # 128 flat rows
FEATURES = 32             # number_of_features
GCN1 = 32                 # args.first_gcn_dimensions
GCN2 = 32                 # args.second_gcn_dimensions
DENSE1 = 16               # args.first_dense_neurons
DENSE2 = 8                # args.second_dense_neurons
EMB_DIM = DENSE1 * DENSE2     # 128 = hierarchical model input dim
GD2 = NUM_GRAPHS * DENSE2     # 64 = graph-expanded attention width
MACRO_HIDDEN = 8          # SuperMacroGCN hidden width
LABELS = 4                # number_of_labels
MISC_COLS = 128           # lane-dense packed misc output width

# ------------------------- packed parameter slab ----------------------------
_LAYOUT = [
    ("w1",   (FEATURES, GCN1)),
    ("b1",   (1, GCN1)),
    ("w2",   (GCN1, GCN2)),
    ("b2",   (1, GCN2)),
    ("wf1",  (GCN2, DENSE1)),
    ("bf1",  (1, DENSE1)),
    ("wf2r", (DENSE1, GD2)),                    # wf2 pre-tiled x NUM_GRAPHS
    ("bf2r", (1, GD2)),                         # bf2 pre-tiled x NUM_GRAPHS
    ("wcu1", (EMB_DIM, LABELS + MACRO_HIDDEN)),  # [wc | u1] side by side
    ("bcc1", (1, LABELS + MACRO_HIDDEN)),        # [bc | c1]
    ("u2",   (MACRO_HIDDEN, MACRO_HIDDEN)),
    ("c2",   (1, MACRO_HIDDEN)),
    ("u3",   (MACRO_HIDDEN, LABELS)),
    ("c3",   (1, LABELS)),
]
_SHAPE = dict(_LAYOUT)
_OFF = {}
_row = 0
for _n, (_r, _c) in _LAYOUT:
    _OFF[_n] = _row
    _row = (_row + _r + 7) & ~7          # keep every block 8-row aligned
SLAB_ROWS = _row                          # = 312 (multiple of 8)


def pack_params(p):
    """Pack all weights/biases into one lane-dense (SLAB_ROWS, 128) f32 slab."""
    slab = jnp.zeros((SLAB_ROWS, 128), jnp.float32)
    entries = {
        "w1": p["w1"], "b1": p["b1"], "w2": p["w2"], "b2": p["b2"],
        "wf1": p["wf1"], "bf1": p["bf1"],
        "wf2r": jnp.tile(p["wf2"], (1, NUM_GRAPHS)),
        "bf2r": jnp.tile(p["bf2"], (1, NUM_GRAPHS)),
        "wcu1": jnp.concatenate([p["wc"], p["u1"]], axis=1),
        "bcc1": jnp.concatenate([p["bc"], p["c1"]], axis=1),
        "u2": p["u2"], "c2": p["c2"], "u3": p["u3"], "c3": p["c3"],
    }
    for name, arr in entries.items():
        r0 = _OFF[name]
        r, c = arr.shape
        slab = slab.at[r0:r0 + r, 0:c].set(arr.astype(jnp.float32))
    return slab


# --------------------------- fused SEAL kernel ------------------------------
def seal_kernel(x_ref, a_ref, am_ref, p_ref, emb_ref, misc_ref):
    f32 = jnp.float32

    def prm(name):
        r0 = _OFF[name]
        r, c = _SHAPE[name]
        return p_ref[pl.ds(r0, r), pl.ds(0, c)]

    x = x_ref[...]                        # (GN, F)   stacked node features
    a = a_ref[...]                        # (GN, GN)  block-diag normalized adjacency
    am = am_ref[...]                      # (G, G)    normalized macro adjacency

    # ---------------- graph-level GCN (all graphs in one matmul chain) ---------
    ax = jnp.dot(a, x, preferred_element_type=f32)
    h1 = jnp.maximum(
        jnp.dot(ax, prm("w1"), preferred_element_type=f32) + prm("b1"), 0.0)
    ah1 = jnp.dot(a, h1, preferred_element_type=f32)
    h2 = jnp.dot(ah1, prm("w2"), preferred_element_type=f32) + prm("b2")      # (GN, GCN2)
    abs1 = jnp.tanh(
        jnp.dot(h2, prm("wf1"), preferred_element_type=f32) + prm("bf1"))     # (GN, D1)

    # attention logits replicated per graph along lanes (wf2 pre-tiled in slab)
    logits_rep = jnp.dot(abs1, prm("wf2r"), preferred_element_type=f32) \
        + prm("bf2r")                                                         # (GN, G*D2)

    # ---------------- per-graph softmax in the expanded layout -----------------
    rr = jax.lax.broadcasted_iota(jnp.int32, (GN, GD2), 0)
    kk = jax.lax.broadcasted_iota(jnp.int32, (GN, GD2), 1)
    in_seg = (kk >> 3) == (rr >> 4)          # D2 = 8 lanes/graph, 16 rows/graph

    masked = jnp.where(in_seg, logits_rep, -1e30)
    m_flat = jnp.max(masked, axis=0, keepdims=True)        # per-(graph, p) max
    e_rep = jnp.exp(masked - m_flat)                       # 0 outside own graph
    denom = jnp.sum(e_rep, axis=0, keepdims=True)          # >= 1 always
    q = e_rep * pl.reciprocal(denom, approx=True)          # seg-masked attention (GN, G*D2)

    # --------- lane-dense flat graph embeddings (no in-kernel reshape) ---------
    jj = jax.lax.broadcasted_iota(jnp.int32, (GD2, EMB_DIM), 0)
    k2 = jax.lax.broadcasted_iota(jnp.int32, (GD2, EMB_DIM), 1)
    rmat = ((k2 >> 4) == (jj & (DENSE2 - 1))).astype(f32)          # (64, 128)
    dd = jax.lax.broadcasted_iota(jnp.int32, (DENSE1, EMB_DIM), 0)
    k3 = jax.lax.broadcasted_iota(jnp.int32, (DENSE1, EMB_DIM), 1)
    tmat = ((k3 & (DENSE1 - 1)) == dd).astype(f32)                 # (16, 128)

    att_exp = jnp.dot(q, rmat, preferred_element_type=f32)         # att[r, k>>4]
    abs_exp = jnp.dot(abs1, tmat, preferred_element_type=f32)      # abs1[r, k&15]

    gg = jax.lax.broadcasted_iota(jnp.int32, (NUM_GRAPHS, GN), 0)
    r2 = jax.lax.broadcasted_iota(jnp.int32, (NUM_GRAPHS, GN), 1)
    seg_t = ((r2 >> 4) == gg).astype(f32)                          # (G, GN)

    loc_emb = jnp.dot(seg_t, att_exp * abs_exp, preferred_element_type=f32)   # (G, EMB)
    emb_ref[...] = loc_emb

    # --------- in-graph classifier + first macro layer (shared LHS matmul) ------
    combo = jnp.dot(loc_emb, prm("wcu1"), preferred_element_type=f32)         # (G, L+H)
    bcc1 = prm("bcc1")                                                        # (1, L+H)
    ic = jax.nn.log_softmax(combo[:, :LABELS] + bcc1[:, :LABELS], axis=-1)    # (G, L)

    # ---------------- fused hierarchical SuperMacroGCN (3 layers) ---------------
    z1 = jnp.maximum(
        jnp.dot(am, combo[:, LABELS:], preferred_element_type=f32)
        + bcc1[:, LABELS:], 0.0)                                              # (G, H)
    z2 = jnp.maximum(
        jnp.dot(am, jnp.dot(z1, prm("u2"), preferred_element_type=f32),
                preferred_element_type=f32) + prm("c2"), 0.0)                 # (G, H)
    z3 = jnp.dot(am, jnp.dot(z2, prm("u3"), preferred_element_type=f32),
                 preferred_element_type=f32) + prm("c3")                      # (G, L)
    hc = jax.nn.log_softmax(z3, axis=-1)

    # ------------------- orthogonality penalty (per graph) ----------------------
    # Q^T Q is block-diagonal with blocks G_g = A_g^T A_g; per graph:
    # ||G_g - I||_F^2 = sum_j (row_j(QtQ)^2 - 2*diag_j) + D2 over rows j of block g.
    qtq = jnp.einsum('rj,rk->jk', q, q, preferred_element_type=f32)           # (GD2, GD2)
    d1 = jax.lax.broadcasted_iota(jnp.int32, (GD2, GD2), 0)
    d2 = jax.lax.broadcasted_iota(jnp.int32, (GD2, GD2), 1)
    eye_flat = (d1 == d2).astype(f32)
    row_q = jnp.sum(qtq * (qtq - 2.0 * eye_flat), axis=1, keepdims=True)      # (GD2, 1)

    g2 = jax.lax.broadcasted_iota(jnp.int32, (NUM_GRAPHS, GD2), 0)
    j2 = jax.lax.broadcasted_iota(jnp.int32, (NUM_GRAPHS, GD2), 1)
    block_t = ((j2 >> 3) == g2).astype(f32)                                   # (G, GD2)
    per_g = jnp.dot(block_t, row_q, preferred_element_type=f32)               # (G, 1)
    pen_g = jnp.sqrt(jnp.maximum(per_g + float(DENSE2), 0.0))                 # (G, 1)
    pen = jnp.sum(pen_g, axis=0, keepdims=True) * (1.0 / NUM_GRAPHS)          # (1, 1)

    # ------------------ packed lane-dense misc output slab ----------------------
    misc_ref[...] = jnp.zeros_like(misc_ref)
    misc_ref[:, pl.ds(0, LABELS)] = ic
    misc_ref[:, pl.ds(LABELS, LABELS)] = hc
    misc_ref[:, pl.ds(2 * LABELS, MACRO_HIDDEN)] = z2
    misc_ref[pl.ds(0, 1), pl.ds(2 * LABELS + MACRO_HIDDEN, 1)] = pen


def run_seal(x_flat, a_bd, macro_adj, slab):
    vmem = lambda: pl.BlockSpec(memory_space=pltpu.MemorySpace.VMEM)
    out_shape = (
        jax.ShapeDtypeStruct((NUM_GRAPHS, EMB_DIM), jnp.float32),   # loc embeddings
        jax.ShapeDtypeStruct((NUM_GRAPHS, MISC_COLS), jnp.float32), # packed ic|hc|gemb|pen
    )
    return pl.pallas_call(
        seal_kernel,
        out_shape=out_shape,
        in_specs=[vmem() for _ in range(4)],
        out_specs=(vmem(), vmem()),
        cost_estimate=pl.CostEstimate(
            flops=7_200_000, transcendentals=11_000, bytes_accessed=260_000),
    )(x_flat, a_bd, macro_adj, slab)


# --------------------------------- glue -------------------------------------
def normalize_adj(a):
    """Symmetric GCN normalization: D^{-1/2} (A + I) D^{-1/2}."""
    n = a.shape[-1]
    a = a + jnp.eye(n, dtype=a.dtype)
    deg = jnp.sum(a, axis=-1)
    dinv = 1.0 / jnp.sqrt(deg)
    return a * dinv[..., :, None] * dinv[..., None, :]


def init_params(key):
    def linear(key, fan_in, shape):
        bound = 1.0 / jnp.sqrt(jnp.float32(fan_in))
        return jax.random.uniform(key, shape, jnp.float32, -bound, bound)

    ks = jax.random.split(key, 20)
    return {
        # SAGE (graph-level model)
        "w1": linear(ks[0], FEATURES, (FEATURES, GCN1)),
        "b1": linear(ks[1], FEATURES, (1, GCN1)),
        "w2": linear(ks[2], GCN1, (GCN1, GCN2)),
        "b2": linear(ks[3], GCN1, (1, GCN2)),
        "wf1": linear(ks[4], GCN2, (GCN2, DENSE1)),
        "bf1": linear(ks[5], GCN2, (1, DENSE1)),
        "wf2": linear(ks[6], DENSE1, (DENSE1, DENSE2)),
        "bf2": linear(ks[7], DENSE1, (1, DENSE2)),
        # graph-level classifier on the flattened (DENSE2-major) embedding
        "wc": linear(ks[8], EMB_DIM, (EMB_DIM, LABELS)),
        "bc": linear(ks[9], EMB_DIM, (1, LABELS)),
        # SuperMacroGCN (hierarchical model), 3 layers
        "u1": linear(ks[10], EMB_DIM, (EMB_DIM, MACRO_HIDDEN)),
        "c1": linear(ks[11], EMB_DIM, (1, MACRO_HIDDEN)),
        "u2": linear(ks[12], MACRO_HIDDEN, (MACRO_HIDDEN, MACRO_HIDDEN)),
        "c2": linear(ks[13], MACRO_HIDDEN, (1, MACRO_HIDDEN)),
        "u3": linear(ks[14], MACRO_HIDDEN, (MACRO_HIDDEN, LABELS)),
        "c3": linear(ks[15], MACRO_HIDDEN, (1, LABELS)),
    }


def seal_forward(features, adj, macro_adj, params):
    G = features.shape[0]
    # stack node features graph-major and build the block-diagonal adjacency
    x_flat = features.reshape(G * NODES, FEATURES)
    eye_g = jnp.eye(G, dtype=adj.dtype)
    a_bd = (adj[:, :, None, :] * eye_g[:, None, :, None]).reshape(G * NODES, G * NODES)
    slab = pack_params(params)

    loc_emb, misc = run_seal(x_flat, a_bd, macro_adj, slab)
    ic_pred = misc[:, 0:LABELS]
    hc_pred = misc[:, LABELS:2 * LABELS]
    global_emb = misc[:, 2 * LABELS:2 * LABELS + MACRO_HIDDEN]
    penalties = misc[0, 2 * LABELS + MACRO_HIDDEN]      # mean penalty over graphs
    return hc_pred, ic_pred, loc_emb, global_emb, penalties


# --------------------------------- main --------------------------------------
if __name__ == "__main__":
    key = jax.random.PRNGKey(0)
    k_feat, k_adj, k_params = jax.random.split(key, 3)

    # node features for every micro graph
    features = jax.random.normal(k_feat, (NUM_GRAPHS, NODES, FEATURES), jnp.float32)

    # random symmetric binary adjacency per micro graph, then GCN-normalized
    raw = (jax.random.uniform(k_adj, (NUM_GRAPHS, NODES, NODES)) < 0.3).astype(jnp.float32)
    raw = jnp.maximum(raw, jnp.swapaxes(raw, -1, -2))
    raw = raw * (1.0 - jnp.eye(NODES)[None])
    adj = normalize_adj(raw)

    # macro_edges: deterministic ring over the graphs -> dense normalized adjacency
    src = jnp.arange(NUM_GRAPHS)
    dst = (src + 1) % NUM_GRAPHS
    macro_raw = jnp.zeros((NUM_GRAPHS, NUM_GRAPHS), jnp.float32)
    macro_raw = macro_raw.at[src, dst].set(1.0).at[dst, src].set(1.0)
    macro_adj = normalize_adj(macro_raw)

    params = init_params(k_params)

    fwd = jax.jit(seal_forward)
    outs = fwd(features, adj, macro_adj, params)
    outs = jax.block_until_ready(outs)

    hc_predictions, ic_predictions, loc_embeddings, global_embeddings, penalties = outs
    assert hc_predictions.shape == (NUM_GRAPHS, LABELS)
    assert ic_predictions.shape == (NUM_GRAPHS, LABELS)
    assert loc_embeddings.shape == (NUM_GRAPHS, EMB_DIM)
    assert global_embeddings.shape == (NUM_GRAPHS, MACRO_HIDDEN)
    assert penalties.shape == ()
    assert bool(jnp.all(jnp.isfinite(hc_predictions)))
    assert bool(jnp.all(jnp.isfinite(ic_predictions)))
    assert bool(jnp.all(jnp.isfinite(loc_embeddings)))
    assert bool(jnp.isfinite(penalties))

    print("KERNEL_OK")
</pallas_src>

<mosaic_0001>
module attributes {stable_mosaic.version = 11 : i64} {
  func.func @seal_kernel(%arg0: memref<128x32xf32, #tpu.memory_space<vmem>>, %arg1: memref<128x128xf32, #tpu.memory_space<vmem>>, %arg2: memref<8x8xf32, #tpu.memory_space<vmem>>, %arg3: memref<312x128xf32, #tpu.memory_space<vmem>>, %arg4: memref<8x128xf32, #tpu.memory_space<vmem>>, %arg5: memref<8x128xf32, #tpu.memory_space<vmem>>) attributes {dimension_semantics = [], scalar_prefetch = 0 : i64, scratch_operands = 0 : i64, tpu.core_type = #tpu.core_type<tc>} {
    %c0 = arith.constant 0 : index
    %c0_0 = arith.constant 0 : index
    %0 = vector.load %arg0[%c0, %c0_0] : memref<128x32xf32, #tpu.memory_space<vmem>>, vector<128x32xf32>
    %c0_1 = arith.constant 0 : index
    %c0_2 = arith.constant 0 : index
    %1 = vector.load %arg1[%c0_1, %c0_2] : memref<128x128xf32, #tpu.memory_space<vmem>>, vector<128x128xf32>
    %c0_3 = arith.constant 0 : index
    %c0_4 = arith.constant 0 : index
    %2 = vector.load %arg2[%c0_3, %c0_4] : memref<8x8xf32, #tpu.memory_space<vmem>>, vector<8x8xf32>
    %cst = arith.constant dense<0.000000e+00> : vector<128x32xf32>
    %3 = tpu.matmul %1, %0, %cst {dimension_numbers = #tpu.dot_dimension_numbers<[1], [0], [0], [1], [0, 0, 1, 1], [], []>} : vector<128x128xf32>, vector<128x32xf32>, vector<128x32xf32> -> vector<128x32xf32>
    %c0_5 = arith.constant 0 : index
    %c0_6 = arith.constant 0 : index
    %4 = vector.load %arg3[%c0_5, %c0_6] : memref<312x128xf32, #tpu.memory_space<vmem>>, vector<32x32xf32>
    %cst_7 = arith.constant dense<0.000000e+00> : vector<128x32xf32>
    %5 = tpu.matmul %3, %4, %cst_7 {dimension_numbers = #tpu.dot_dimension_numbers<[1], [0], [0], [1], [0, 0, 1, 1], [], []>} : vector<128x32xf32>, vector<32x32xf32>, vector<128x32xf32> -> vector<128x32xf32>
    %c32 = arith.constant 32 : index
    %c0_8 = arith.constant 0 : index
    %6 = vector.load %arg3[%c32, %c0_8] : memref<312x128xf32, #tpu.memory_space<vmem>>, vector<1x32xf32>
    %7 = vector.broadcast %6 : vector<1x32xf32> to vector<128x32xf32>
    %8 = arith.addf %5, %7 : vector<128x32xf32>
    %cst_9 = arith.constant 0.000000e+00 : f32
    %9 = vector.broadcast %cst_9 : f32 to vector<128x32xf32>
    %10 = arith.maximumf %8, %9 : vector<128x32xf32>
    %cst_10 = arith.constant dense<0.000000e+00> : vector<128x32xf32>
    %11 = tpu.matmul %1, %10, %cst_10 {dimension_numbers = #tpu.dot_dimension_numbers<[1], [0], [0], [1], [0, 0, 1, 1], [], []>} : vector<128x128xf32>, vector<128x32xf32>, vector<128x32xf32> -> vector<128x32xf32>
    %c40 = arith.constant 40 : index
    %c0_11 = arith.constant 0 : index
    %12 = vector.load %arg3[%c40, %c0_11] : memref<312x128xf32, #tpu.memory_space<vmem>>, vector<32x32xf32>
    %cst_12 = arith.constant dense<0.000000e+00> : vector<128x32xf32>
    %13 = tpu.matmul %11, %12, %cst_12 {dimension_numbers = #tpu.dot_dimension_numbers<[1], [0], [0], [1], [0, 0, 1, 1], [], []>} : vector<128x32xf32>, vector<32x32xf32>, vector<128x32xf32> -> vector<128x32xf32>
    %c72 = arith.constant 72 : index
    %c0_13 = arith.constant 0 : index
    %14 = vector.load %arg3[%c72, %c0_13] : memref<312x128xf32, #tpu.memory_space<vmem>>, vector<1x32xf32>
    %15 = vector.broadcast %14 : vector<1x32xf32> to vector<128x32xf32>
    %16 = arith.addf %13, %15 : vector<128x32xf32>
    %c80 = arith.constant 80 : index
    %c0_14 = arith.constant 0 : index
    %17 = vector.load %arg3[%c80, %c0_14] : memref<312x128xf32, #tpu.memory_space<vmem>>, vector<32x16xf32>
    %cst_15 = arith.constant dense<0.000000e+00> : vector<128x16xf32>
    %18 = tpu.matmul %16, %17, %cst_15 {dimension_numbers = #tpu.dot_dimension_numbers<[1], [0], [0], [1], [0, 0, 1, 1], [], []>} : vector<128x32xf32>, vector<32x16xf32>, vector<128x16xf32> -> vector<128x16xf32>
    %c112 = arith.constant 112 : index
    %c0_16 = arith.constant 0 : index
    %19 = vector.load %arg3[%c112, %c0_16] : memref<312x128xf32, #tpu.memory_space<vmem>>, vector<1x16xf32>
    %20 = vector.broadcast %19 : vector<1x16xf32> to vector<128x16xf32>
    %21 = arith.addf %18, %20 : vector<128x16xf32>
    %22 = math.tanh %21 : vector<128x16xf32>
    %c120 = arith.constant 120 : index
    %c0_17 = arith.constant 0 : index
    %23 = vector.load %arg3[%c120, %c0_17] : memref<312x128xf32, #tpu.memory_space<vmem>>, vector<16x64xf32>
    %cst_18 = arith.constant dense<0.000000e+00> : vector<128x64xf32>
    %24 = tpu.matmul %22, %23, %cst_18 {dimension_numbers = #tpu.dot_dimension_numbers<[1], [0], [0], [1], [0, 0, 1, 1], [], []>} : vector<128x16xf32>, vector<16x64xf32>, vector<128x64xf32> -> vector<128x64xf32>
    %c136 = arith.constant 136 : index
    %c0_19 = arith.constant 0 : index
    %25 = vector.load %arg3[%c136, %c0_19] : memref<312x128xf32, #tpu.memory_space<vmem>>, vector<1x64xf32>
    %26 = vector.broadcast %25 : vector<1x64xf32> to vector<128x64xf32>
    %27 = arith.addf %24, %26 : vector<128x64xf32>
    %28 = tpu.iota {dimensions = array<i32: 0>} : vector<128x64xi32>
    %29 = tpu.iota {dimensions = array<i32: 1>} : vector<128x64xi32>
    %c3_i32 = arith.constant 3 : i32
    %30 = vector.broadcast %c3_i32 : i32 to vector<128x64xi32>
    %31 = arith.shrsi %29, %30 : vector<128x64xi32>
    %c4_i32 = arith.constant 4 : i32
    %32 = vector.broadcast %c4_i32 : i32 to vector<128x64xi32>
    %33 = arith.shrsi %28, %32 : vector<128x64xi32>
    %34 = arith.cmpi eq, %31, %33 : vector<128x64xi32>
    %cst_20 = arith.constant -1.000000e+30 : f32
    %35 = vector.broadcast %cst_20 : f32 to vector<128x64xf32>
    %36 = arith.select %34, %27, %35 : vector<128x64xi1>, vector<128x64xf32>
    %cst_21 = arith.constant dense<0xFF800000> : vector<64xf32>
    %37 = vector.multi_reduction <maximumf>, %36, %cst_21 [0] : vector<128x64xf32> to vector<64xf32>
    %38 = vector.shape_cast %37 : vector<64xf32> to vector<1x64xf32>
    %39 = vector.broadcast %38 : vector<1x64xf32> to vector<128x64xf32>
    %40 = arith.subf %36, %39 : vector<128x64xf32>
    %41 = math.exp %40 : vector<128x64xf32>
    %cst_22 = arith.constant dense<0.000000e+00> : vector<64xf32>
    %42 = vector.multi_reduction <add>, %41, %cst_22 [0] : vector<128x64xf32> to vector<64xf32>
    %43 = vector.shape_cast %42 : vector<64xf32> to vector<1x64xf32>
    %44 = tpu.reciprocal %43 {approx = true} : vector<1x64xf32> -> vector<1x64xf32>
    %45 = vector.broadcast %44 : vector<1x64xf32> to vector<128x64xf32>
    %46 = arith.mulf %41, %45 : vector<128x64xf32>
    %47 = tpu.iota {dimensions = array<i32: 0>} : vector<64x128xi32>
    %48 = tpu.iota {dimensions = array<i32: 1>} : vector<64x128xi32>
    %c4_i32_23 = arith.constant 4 : i32
    %49 = vector.broadcast %c4_i32_23 : i32 to vector<64x128xi32>
    %50 = arith.shrsi %48, %49 : vector<64x128xi32>
    %c7_i32 = arith.constant 7 : i32
    %51 = vector.broadcast %c7_i32 : i32 to vector<64x128xi32>
    %52 = arith.andi %47, %51 : vector<64x128xi32>
    %53 = arith.cmpi eq, %50, %52 : vector<64x128xi32>
    %54 = arith.extui %53 : vector<64x128xi1> to vector<64x128xi32>
    %55 = arith.sitofp %54 : vector<64x128xi32> to vector<64x128xf32>
    %56 = tpu.iota {dimensions = array<i32: 0>} : vector<16x128xi32>
    %57 = tpu.iota {dimensions = array<i32: 1>} : vector<16x128xi32>
    %c15_i32 = arith.constant 15 : i32
    %58 = vector.broadcast %c15_i32 : i32 to vector<16x128xi32>
    %59 = arith.andi %57, %58 : vector<16x128xi32>
    %60 = arith.cmpi eq, %59, %56 : vector<16x128xi32>
    %61 = arith.extui %60 : vector<16x128xi1> to vector<16x128xi32>
    %62 = arith.sitofp %61 : vector<16x128xi32> to vector<16x128xf32>
    %cst_24 = arith.constant dense<0.000000e+00> : vector<128x128xf32>
    %63 = tpu.matmul %46, %55, %cst_24 {dimension_numbers = #tpu.dot_dimension_numbers<[1], [0], [0], [1], [0, 0, 1, 1], [], []>} : vector<128x64xf32>, vector<64x128xf32>, vector<128x128xf32> -> vector<128x128xf32>
    %cst_25 = arith.constant dense<0.000000e+00> : vector<128x128xf32>
    %64 = tpu.matmul %22, %62, %cst_25 {dimension_numbers = #tpu.dot_dimension_numbers<[1], [0], [0], [1], [0, 0, 1, 1], [], []>} : vector<128x16xf32>, vector<16x128xf32>, vector<128x128xf32> -> vector<128x128xf32>
    %65 = tpu.iota {dimensions = array<i32: 0>} : vector<8x128xi32>
    %66 = tpu.iota {dimensions = array<i32: 1>} : vector<8x128xi32>
    %c4_i32_26 = arith.constant 4 : i32
    %67 = vector.broadcast %c4_i32_26 : i32 to vector<8x128xi32>
    %68 = arith.shrsi %66, %67 : vector<8x128xi32>
    %69 = arith.cmpi eq, %68, %65 : vector<8x128xi32>
    %70 = arith.extui %69 : vector<8x128xi1> to vector<8x128xi32>
    %71 = arith.sitofp %70 : vector<8x128xi32> to vector<8x128xf32>
    %72 = arith.mulf %63, %64 : vector<128x128xf32>
    %cst_27 = arith.constant dense<0.000000e+00> : vector<8x128xf32>
    %73 = tpu.matmul %71, %72, %cst_27 {dimension_numbers = #tpu.dot_dimension_numbers<[1], [0], [0], [1], [0, 0, 1, 1], [], []>} : vector<8x128xf32>, vector<128x128xf32>, vector<8x128xf32> -> vector<8x128xf32>
    %c0_28 = arith.constant 0 : index
    %c0_29 = arith.constant 0 : index
    %74 = vector.load %arg4[%c0_28, %c0_29] : memref<8x128xf32, #tpu.memory_space<vmem>>, vector<8x128xf32>
    tpu.vector_store %arg4[%c0_28, %c0_29], %73 {strides = array<i32>} : memref<8x128xf32, #tpu.memory_space<vmem>>, vector<8x128xf32>,
    %c144 = arith.constant 144 : index
    %c0_30 = arith.constant 0 : index
    %75 = vector.load %arg3[%c144, %c0_30] : memref<312x128xf32, #tpu.memory_space<vmem>>, vector<128x12xf32>
    %cst_31 = arith.constant dense<0.000000e+00> : vector<8x12xf32>
    %76 = tpu.matmul %73, %75, %cst_31 {dimension_numbers = #tpu.dot_dimension_numbers<[1], [0], [0], [1], [0, 0, 1, 1], [], []>} : vector<8x128xf32>, vector<128x12xf32>, vector<8x12xf32> -> vector<8x12xf32>
    %c272 = arith.constant 272 : index
    %c0_32 = arith.constant 0 : index
    %77 = vector.load %arg3[%c272, %c0_32] : memref<312x128xf32, #tpu.memory_space<vmem>>, vector<1x12xf32>
    %78 = vector.extract_strided_slice %76 {offsets = [0, 0], sizes = [8, 4], strides = [1, 1]} : vector<8x12xf32> to vector<8x4xf32>
    %79 = vector.extract_strided_slice %77 {offsets = [0, 0], sizes = [1, 4], strides = [1, 1]} : vector<1x12xf32> to vector<1x4xf32>
    %80 = vector.broadcast %79 : vector<1x4xf32> to vector<8x4xf32>
    %81 = arith.addf %78, %80 : vector<8x4xf32>
    %cst_33 = arith.constant dense<0xFF800000> : vector<8xf32>
    %82 = vector.multi_reduction <maximumf>, %81, %cst_33 [1] : vector<8x4xf32> to vector<8xf32>
    %cst_34 = arith.constant 0xFF800000 : f32
    %83 = vector.broadcast %cst_34 : f32 to vector<8xf32>
    %84 = arith.maximumf %83, %82 : vector<8xf32>
    %85 = vector.shape_cast %84 : vector<8xf32> to vector<8x1xf32>
    %86 = vector.broadcast %85 : vector<8x1xf32> to vector<8x4xf32>
    %87 = arith.subf %81, %86 : vector<8x4xf32>
    %88 = math.exp %87 : vector<8x4xf32>
    %cst_35 = arith.constant dense<0.000000e+00> : vector<8xf32>
    %89 = vector.multi_reduction <add>, %88, %cst_35 [1] : vector<8x4xf32> to vector<8xf32>
    %90 = vector.shape_cast %89 : vector<8xf32> to vector<8x1xf32>
    %91 = math.log %90 : vector<8x1xf32>
    %92 = vector.broadcast %91 : vector<8x1xf32> to vector<8x4xf32>
    %93 = arith.subf %87, %92 : vector<8x4xf32>
    %94 = vector.extract_strided_slice %76 {offsets = [0, 4], sizes = [8, 8], strides = [1, 1]} : vector<8x12xf32> to vector<8x8xf32>
    %cst_36 = arith.constant dense<0.000000e+00> : vector<8x8xf32>
    %95 = tpu.matmul %2, %94, %cst_36 {dimension_numbers = #tpu.dot_dimension_numbers<[1], [0], [0], [1], [0, 0, 1, 1], [], []>} : vector<8x8xf32>, vector<8x8xf32>, vector<8x8xf32> -> vector<8x8xf32>
    %96 = vector.extract_strided_slice %77 {offsets = [0, 4], sizes = [1, 8], strides = [1, 1]} : vector<1x12xf32> to vector<1x8xf32>
    %97 = vector.broadcast %96 : vector<1x8xf32> to vector<8x8xf32>
    %98 = arith.addf %95, %97 : vector<8x8xf32>
    %cst_37 = arith.constant 0.000000e+00 : f32
    %99 = vector.broadcast %cst_37 : f32 to vector<8x8xf32>
    %100 = arith.maximumf %98, %99 : vector<8x8xf32>
    %c280 = arith.constant 280 : index
    %c0_38 = arith.constant 0 : index
    %101 = vector.load %arg3[%c280, %c0_38] : memref<312x128xf32, #tpu.memory_space<vmem>>, vector<8x8xf32>
    %cst_39 = arith.constant dense<0.000000e+00> : vector<8x8xf32>
    %102 = tpu.matmul %100, %101, %cst_39 {dimension_numbers = #tpu.dot_dimension_numbers<[1], [0], [0], [1], [0, 0, 1, 1], [], []>} : vector<8x8xf32>, vector<8x8xf32>, vector<8x8xf32> -> vector<8x8xf32>
    %cst_40 = arith.constant dense<0.000000e+00> : vector<8x8xf32>
    %103 = tpu.matmul %2, %102, %cst_40 {dimension_numbers = #tpu.dot_dimension_numbers<[1], [0], [0], [1], [0, 0, 1, 1], [], []>} : vector<8x8xf32>, vector<8x8xf32>, vector<8x8xf32> -> vector<8x8xf32>
    %c288 = arith.constant 288 : index
    %c0_41 = arith.constant 0 : index
    %104 = vector.load %arg3[%c288, %c0_41] : memref<312x128xf32, #tpu.memory_space<vmem>>, vector<1x8xf32>
    %105 = vector.broadcast %104 : vector<1x8xf32> to vector<8x8xf32>
    %106 = arith.addf %103, %105 : vector<8x8xf32>
    %cst_42 = arith.constant 0.000000e+00 : f32
    %107 = vector.broadcast %cst_42 : f32 to vector<8x8xf32>
    %108 = arith.maximumf %106, %107 : vector<8x8xf32>
    %c296 = arith.constant 296 : index
    %c0_43 = arith.constant 0 : index
    %109 = vector.load %arg3[%c296, %c0_43] : memref<312x128xf32, #tpu.memory_space<vmem>>, vector<8x4xf32>
    %cst_44 = arith.constant dense<0.000000e+00> : vector<8x4xf32>
    %110 = tpu.matmul %108, %109, %cst_44 {dimension_numbers = #tpu.dot_dimension_numbers<[1], [0], [0], [1], [0, 0, 1, 1], [], []>} : vector<8x8xf32>, vector<8x4xf32>, vector<8x4xf32> -> vector<8x4xf32>
    %cst_45 = arith.constant dense<0.000000e+00> : vector<8x4xf32>
    %111 = tpu.matmul %2, %110, %cst_45 {dimension_numbers = #tpu.dot_dimension_numbers<[1], [0], [0], [1], [0, 0, 1, 1], [], []>} : vector<8x8xf32>, vector<8x4xf32>, vector<8x4xf32> -> vector<8x4xf32>
    %c304 = arith.constant 304 : index
    %c0_46 = arith.constant 0 : index
    %112 = vector.load %arg3[%c304, %c0_46] : memref<312x128xf32, #tpu.memory_space<vmem>>, vector<1x4xf32>
    %113 = vector.broadcast %112 : vector<1x4xf32> to vector<8x4xf32>
    %114 = arith.addf %111, %113 : vector<8x4xf32>
    %cst_47 = arith.constant dense<0xFF800000> : vector<8xf32>
    %115 = vector.multi_reduction <maximumf>, %114, %cst_47 [1] : vector<8x4xf32> to vector<8xf32>
    %cst_48 = arith.constant 0xFF800000 : f32
    %116 = vector.broadcast %cst_48 : f32 to vector<8xf32>
    %117 = arith.maximumf %116, %115 : vector<8xf32>
    %118 = vector.shape_cast %117 : vector<8xf32> to vector<8x1xf32>
    %119 = vector.broadcast %118 : vector<8x1xf32> to vector<8x4xf32>
    %120 = arith.subf %114, %119 : vector<8x4xf32>
    %121 = math.exp %120 : vector<8x4xf32>
    %cst_49 = arith.constant dense<0.000000e+00> : vector<8xf32>
    %122 = vector.multi_reduction <add>, %121, %cst_49 [1] : vector<8x4xf32> to vector<8xf32>
    %123 = vector.shape_cast %122 : vector<8xf32> to vector<8x1xf32>
    %124 = math.log %123 : vector<8x1xf32>
    %125 = vector.broadcast %124 : vector<8x1xf32> to vector<8x4xf32>
    %126 = arith.subf %120, %125 : vector<8x4xf32>
    "tpu.trace_start"() <{level = 10 : i32, message = "rj,rk->jk"}> : () -> ()
    %cst_50 = arith.constant dense<0.000000e+00> : vector<64x64xf32>
    %127 = tpu.matmul %46, %46, %cst_50 {dimension_numbers = #tpu.dot_dimension_numbers<[0], [0], [1], [1], [0, 1, 1, 1], [], []>} : vector<128x64xf32>, vector<128x64xf32>, vector<64x64xf32> -> vector<64x64xf32>
    "tpu.trace_stop"() : () -> ()
    %128 = tpu.iota {dimensions = array<i32: 0>} : vector<64x64xi32>
    %129 = tpu.iota {dimensions = array<i32: 1>} : vector<64x64xi32>
    %130 = arith.cmpi eq, %128, %129 : vector<64x64xi32>
    %131 = arith.extui %130 : vector<64x64xi1> to vector<64x64xi32>
    %132 = arith.sitofp %131 : vector<64x64xi32> to vector<64x64xf32>
    %cst_51 = arith.constant 2.000000e+00 : f32
    %133 = vector.broadcast %cst_51 : f32 to vector<64x64xf32>
    %134 = arith.mulf %133, %132 : vector<64x64xf32>
    %135 = arith.subf %127, %134 : vector<64x64xf32>
    %136 = arith.mulf %127, %135 : vector<64x64xf32>
    %cst_52 = arith.constant dense<0.000000e+00> : vector<64xf32>
    %137 = vector.multi_reduction <add>, %136, %cst_52 [1] : vector<64x64xf32> to vector<64xf32>
    %138 = vector.shape_cast %137 : vector<64xf32> to vector<64x1xf32>
    %139 = tpu.iota {dimensions = array<i32: 0>} : vector<8x64xi32>
    %140 = tpu.iota {dimensions = array<i32: 1>} : vector<8x64xi32>
    %c3_i32_53 = arith.constant 3 : i32
    %141 = vector.broadcast %c3_i32_53 : i32 to vector<8x64xi32>
    %142 = arith.shrsi %140, %141 : vector<8x64xi32>
    %143 = arith.cmpi eq, %142, %139 : vector<8x64xi32>
    %144 = arith.extui %143 : vector<8x64xi1> to vector<8x64xi32>
    %145 = arith.sitofp %144 : vector<8x64xi32> to vector<8x64xf32>
    %cst_54 = arith.constant dense<0.000000e+00> : vector<8x1xf32>
    %146 = tpu.matmul %145, %138, %cst_54 {dimension_numbers = #tpu.dot_dimension_numbers<[1], [0], [0], [1], [0, 0, 1, 1], [], []>} : vector<8x64xf32>, vector<64x1xf32>, vector<8x1xf32> -> vector<8x1xf32>
    %cst_55 = arith.constant 8.000000e+00 : f32
    %147 = vector.broadcast %cst_55 : f32 to vector<8x1xf32>
    %148 = arith.addf %146, %147 : vector<8x1xf32>
    %cst_56 = arith.constant 0.000000e+00 : f32
    %149 = vector.broadcast %cst_56 : f32 to vector<8x1xf32>
    %150 = arith.maximumf %148, %149 : vector<8x1xf32>
    %151 = math.sqrt %150 : vector<8x1xf32>
    %cst_57 = arith.constant dense<0.000000e+00> : vector<1xf32>
    %152 = vector.multi_reduction <add>, %151, %cst_57 [0] : vector<8x1xf32> to vector<1xf32>
    %153 = vector.shape_cast %152 : vector<1xf32> to vector<1x1xf32>
    %cst_58 = arith.constant 1.250000e-01 : f32
    %154 = vector.broadcast %cst_58 : f32 to vector<1x1xf32>
    %155 = arith.mulf %153, %154 : vector<1x1xf32>
    %cst_59 = arith.constant 0.000000e+00 : f32
    %156 = vector.broadcast %cst_59 : f32 to vector<8x128xf32>
    %c0_60 = arith.constant 0 : index
    %c0_61 = arith.constant 0 : index
    %157 = vector.load %arg5[%c0_60, %c0_61] : memref<8x128xf32, #tpu.memory_space<vmem>>, vector<8x128xf32>
    tpu.vector_store %arg5[%c0_60, %c0_61], %156 {strides = array<i32>} : memref<8x128xf32, #tpu.memory_space<vmem>>, vector<8x128xf32>,
    %c0_62 = arith.constant 0 : index
    %c0_63 = arith.constant 0 : index
    %158 = vector.load %arg5[%c0_62, %c0_63] : memref<8x128xf32, #tpu.memory_space<vmem>>, vector<8x4xf32>
    tpu.vector_store %arg5[%c0_62, %c0_63], %93 {strides = array<i32>} : memref<8x128xf32, #tpu.memory_space<vmem>>, vector<8x4xf32>,
    %c0_64 = arith.constant 0 : index
    %c4 = arith.constant 4 : index
    %159 = vector.load %arg5[%c0_64, %c4] : memref<8x128xf32, #tpu.memory_space<vmem>>, vector<8x4xf32>
    tpu.vector_store %arg5[%c0_64, %c4], %126 {strides = array<i32>} : memref<8x128xf32, #tpu.memory_space<vmem>>, vector<8x4xf32>,
    %c0_65 = arith.constant 0 : index
    %c8 = arith.constant 8 : index
    %160 = vector.load %arg5[%c0_65, %c8] : memref<8x128xf32, #tpu.memory_space<vmem>>, vector<8x8xf32>
    tpu.vector_store %arg5[%c0_65, %c8], %108 {strides = array<i32>} : memref<8x128xf32, #tpu.memory_space<vmem>>, vector<8x8xf32>,
    %c0_66 = arith.constant 0 : index
    %c16 = arith.constant 16 : index
    %161 = vector.load %arg5[%c0_66, %c16] : memref<8x128xf32, #tpu.memory_space<vmem>>, vector<1x1xf32>
    tpu.vector_store %arg5[%c0_66, %c16], %155 {strides = array<i32>} : memref<8x128xf32, #tpu.memory_space<vmem>>, vector<1x1xf32>,
    return
  }
}

</mosaic_0001>

<llo_original>
// kernel: seal_forward.1
$region0: #{seal_forward.1}
  #allocation0 [shape = 'u32[]', space=smem, size = 0x4, offset = 0x4, fixed_abs, tag = 'smem constant byte address 0x4 - core index']
  #allocation1 [shape = 'u32[144,128]{1,0:T(1,128)}', space=vmem, size = 0x12000, scoped, tag = 'internal scratch']
  %s0 = inlined_call_operand.vmem [shape: f32[128,32], index: 0, kind: input, shape index: {}]
  %s1 = inlined_call_operand.vmem [shape: f32[128,128], index: 1, kind: input, shape index: {}]
  %s2 = inlined_call_operand.vmem [shape: f32[8,8], index: 2, kind: input, shape index: {}]
  %s3 = inlined_call_operand.vmem [shape: f32[312,128], index: 3, kind: input, shape index: {}]
  %s4 = inlined_call_operand.hbm [shape: f32[8,128], index: 4, kind: output, shape index: {0}]
  %s5 = inlined_call_operand.vmem [shape: f32[8,128], index: 5, kind: output, shape index: {1}]
  %6 = xla_tuple %s4, %s5
  %s7 = sld [smem:[#allocation0]]
  $region34: #{seal_forward.1} parent=0
    _
  %s9 = ssub.s32 1, %s7
  %s10 = scalar_select 0, %s9, %s7
  $region1: #{seal_forward.1} parent=0
    #allocation2 [shape = 'u8[4096]{0}', space=vmem, size = 0x1000, scoped, tag = 'output window, operand 0, single buffered']
    #allocation3 [shape = 's32[1]{0}', space=sflag, size = 0x4, scoped, tag = 'scoped memory for seal_forward.1']
    %11 = vsyncpa [#allocation3], 0
    // Predicated region
    $region2: #{seal_forward.1} parent=1 // pred_check
      _
    $region3: #{seal_forward.1} parent=1 // pred_check_branch
      %13 = sbr.rel (0) target = $region5
    $region4: #{seal_forward.1} parent=1 // pred_region
      _
    $region5: #{seal_forward.1} parent=1 // pred_fallthru
      _
    // Predicated region
    $region6: #{seal_forward.1} parent=1 // pred_check
      _
    $region7: #{seal_forward.1} parent=1 // pred_check_branch
      %15 = sbr.rel (0) target = $region9
    $region8: #{seal_forward.1} parent=1 // pred_region
      _
    $region9: #{seal_forward.1} parent=1 // pred_fallthru
      _
    // Predicated region
    $region10: #{seal_forward.1} parent=1 // pred_check
      _
    $region11: #{seal_forward.1} parent=1 // pred_check_branch
      %17 = sbr.rel (0) target = $region13
    $region12: #{seal_forward.1} parent=1 // pred_region
      _
    $region13: #{seal_forward.1} parent=1 // pred_fallthru
      _
    // Predicated region
    $region14: #{seal_forward.1} parent=1 // pred_check
      _
    $region15: #{seal_forward.1} parent=1 // pred_check_branch
      %19 = sbr.rel (0) target = $region17
    $region16: #{seal_forward.1} parent=1 // pred_region
      _
    $region17: #{seal_forward.1} parent=1 // pred_fallthru
      _
    %v20 = vld [vmem:[%s0] sm:$0xff]
    %v21 = vld [vmem:[%s0 + $0x8] sm:$0xff]
    %v22 = vld [vmem:[%s0 + $0x10] sm:$0xff]
    %v23 = vld [vmem:[%s0 + $0x18] sm:$0xff]
    %v24 = vld [vmem:[%s0 + $0x20] sm:$0xff]
    %v25 = vld [vmem:[%s0 + $0x28] sm:$0xff]
    %v26 = vld [vmem:[%s0 + $0x30] sm:$0xff]
    %v27 = vld [vmem:[%s0 + $0x38] sm:$0xff]
    %v28 = vld [vmem:[%s0 + $0x40] sm:$0xff]
    %v29 = vld [vmem:[%s0 + $0x48] sm:$0xff]
    %v30 = vld [vmem:[%s0 + $0x50] sm:$0xff]
    %v31 = vld [vmem:[%s0 + $0x58] sm:$0xff]
    %v32 = vld [vmem:[%s0 + $0x60] sm:$0xff]
    %v33 = vld [vmem:[%s0 + $0x68] sm:$0xff]
    %v34 = vld [vmem:[%s0 + $0x70] sm:$0xff]
    %v35 = vld [vmem:[%s0 + $0x78] sm:$0xff]
    %v36 = vld [vmem:[%s1] sm:$0xff]
    %v37 = vld [vmem:[%s1 + $0x8] sm:$0xff]
    %v38 = vld [vmem:[%s1 + $0x10] sm:$0xff]
    %v39 = vld [vmem:[%s1 + $0x18] sm:$0xff]
    %v40 = vld [vmem:[%s1 + $0x20] sm:$0xff]
    %v41 = vld [vmem:[%s1 + $0x28] sm:$0xff]
    %v42 = vld [vmem:[%s1 + $0x30] sm:$0xff]
    %v43 = vld [vmem:[%s1 + $0x38] sm:$0xff]
    %v44 = vld [vmem:[%s1 + $0x40] sm:$0xff]
    %v45 = vld [vmem:[%s1 + $0x48] sm:$0xff]
    %v46 = vld [vmem:[%s1 + $0x50] sm:$0xff]
    %v47 = vld [vmem:[%s1 + $0x58] sm:$0xff]
    %v48 = vld [vmem:[%s1 + $0x60] sm:$0xff]
    %v49 = vld [vmem:[%s1 + $0x68] sm:$0xff]
    %v50 = vld [vmem:[%s1 + $0x70] sm:$0xff]
    %v51 = vld [vmem:[%s1 + $0x78] sm:$0xff]
    %v52 = vld [vmem:[%s2] sm:$0xff]
    %53 = vmatprep.subr.mxu0 0.0
    %54 = vmatpush1.msra.mxu0 %v20
    %55 = vmatprep.subr.mxu0 0.0
    %56 = vmatpush1.msra.mxu0 %v21
    %57 = vmatprep.subr.mxu0 0.0
    %58 = vmatpush1.msra.mxu0 %v22
    %59 = vmatprep.subr.mxu0 0.0
    %60 = vmatpush1.msra.mxu0 %v23
    %61 = vmatprep.subr.mxu0 0.0
    %62 = vmatpush1.msra.mxu0 %v24
    %63 = vmatprep.subr.mxu0 0.0
    %64 = vmatpush1.msra.mxu0 %v25
    %65 = vmatprep.subr.mxu0 0.0
    %66 = vmatpush1.msra.mxu0 %v26
    %67 = vmatprep.subr.mxu0 0.0
    %68 = vmatpush1.msra.mxu0 %v27
    %69 = vmatprep.subr.mxu0 0.0
    %70 = vmatpush1.msra.mxu0 %v28
    %71 = vmatprep.subr.mxu0 0.0
    %72 = vmatpush1.msra.mxu0 %v29
    %73 = vmatprep.subr.mxu0 0.0
    %74 = vmatpush1.msra.mxu0 %v30
    %75 = vmatprep.subr.mxu0 0.0
    %76 = vmatpush1.msra.mxu0 %v31
    %77 = vmatprep.subr.mxu0 0.0
    %78 = vmatpush1.msra.mxu0 %v32
    %79 = vmatprep.subr.mxu0 0.0
    %80 = vmatpush1.msra.mxu0 %v33
    %81 = vmatprep.subr.mxu0 0.0
    %82 = vmatpush1.msra.mxu0 %v34
    %83 = vmatprep.subr.mxu0 0.0
    %84 = vmatpush1.msra.mxu0 %v35
    %85 = vmatprep.subr.mxu0 0.0
    %86 = vmatpush1.msra.mxu0 0.0
    %87 = vmatprep.subr.mxu0 0.0
    %88 = vmatpush1.msra.mxu0 0.0
    %89 = vmatprep.subr.mxu0 0.0
    %90 = vmatpush1.msra.mxu0 0.0
    %91 = vmatprep.subr.mxu0 0.0
    %92 = vmatpush1.msra.mxu0 0.0
    %93 = vmatprep.subr.mxu0 0.0
    %94 = vmatpush1.msra.mxu0 0.0
    %95 = vmatprep.subr.mxu0 0.0
    %96 = vmatpush1.msra.mxu0 0.0
    %97 = vmatprep.subr.mxu0 0.0
    %98 = vmatpush1.msra.mxu0 0.0
    %99 = vmatprep.subr.mxu0 0.0
    %100 = vmatpush1.msra.mxu0 0.0
    %101 = vmatprep.subr.mxu0 0.0
    %102 = vmatpush1.msra.mxu0 0.0
    %103 = vmatprep.subr.mxu0 0.0
    %104 = vmatpush1.msra.mxu0 0.0
    %105 = vmatprep.subr.mxu0 0.0
    %106 = vmatpush1.msra.mxu0 0.0
    %107 = vmatprep.subr.mxu0 0.0
    %108 = vmatpush1.msra.mxu0 0.0
    %109 = vmatprep.subr.mxu0 0.0
    %110 = vmatpush1.msra.mxu0 0.0
    %111 = vmatprep.subr.mxu0 0.0
    %112 = vmatpush1.msra.mxu0 0.0
    %113 = vmatprep.subr.mxu0 0.0
    %114 = vmatpush1.msra.mxu0 0.0
    %115 = vmatprep.subr.mxu0 0.0
    %116 = vmatpush1.msra.mxu0 0.0
    %117 = vmatprep.mubr.f32.mxu0 0.0
    %118 = vmatmul.mubr.f32.gmra.mrb[0].mxu0 %v36
    %v119 = vpop.f32.mrb[0].mxu0
    %v120 = vadd.f32 0.0, %v119
    %v121 = vpop.f32.mrb[0].mxu0
    %122 = vmatprep.mubr.f32.mxu0 0.0
    %123 = vmatmul.mubr.f32.gmra.mrb[0].mxu0 %v37
    %v124 = vpop.f32.mrb[0].mxu0
    %v125 = vadd.f32 0.0, %v124
    %v126 = vpop.f32.mrb[0].mxu0
    %127 = vmatprep.mubr.f32.mxu0 0.0
    %128 = vmatmul.mubr.f32.gmra.mrb[0].mxu0 %v38
    %v129 = vpop.f32.mrb[0].mxu0
    %v130 = vadd.f32 0.0, %v129
    %v131 = vpop.f32.mrb[0].mxu0
    %132 = vmatprep.mubr.f32.mxu0 0.0
    %133 = vmatmul.mubr.f32.gmra.mrb[0].mxu0 %v39
    %v134 = vpop.f32.mrb[0].mxu0
    %v135 = vadd.f32 0.0, %v134
    %v136 = vpop.f32.mrb[0].mxu0
    %137 = vmatprep.mubr.f32.mxu0 0.0
    %138 = vmatmul.mubr.f32.gmra.mrb[0].mxu0 %v40
    %v139 = vpop.f32.mrb[0].mxu0
    %v140 = vadd.f32 0.0, %v139
    %v141 = vpop.f32.mrb[0].mxu0
    %142 = vmatprep.mubr.f32.mxu0 0.0
    %143 = vmatmul.mubr.f32.gmra.mrb[0].mxu0 %v41
    %v144 = vpop.f32.mrb[0].mxu0
    %v145 = vadd.f32 0.0, %v144
    %v146 = vpop.f32.mrb[0].mxu0
    %147 = vmatprep.mubr.f32.mxu0 0.0
    %148 = vmatmul.mubr.f32.gmra.mrb[0].mxu0 %v42
    %v149 = vpop.f32.mrb[0].mxu0
    %v150 = vadd.f32 0.0, %v149
    %v151 = vpop.f32.mrb[0].mxu0
    %152 = vmatprep.mubr.f32.mxu0 0.0
    %153 = vmatmul.mubr.f32.gmra.mrb[0].mxu0 %v43
    %v154 = vpop.f32.mrb[0].mxu0
    %v155 = vadd.f32 0.0, %v154
    %v156 = vpop.f32.mrb[0].mxu0
    %157 = vmatprep.mubr.f32.mxu0 0.0
    %158 = vmatmul.mubr.f32.gmra.mrb[0].mxu0 %v44
    %v159 = vpop.f32.mrb[0].mxu0
    %v160 = vadd.f32 0.0, %v159
    %v161 = vpop.f32.mrb[0].mxu0
    %162 = vmatprep.mubr.f32.mxu0 0.0
    %163 = vmatmul.mubr.f32.gmra.mrb[0].mxu0 %v45
    %v164 = vpop.f32.mrb[0].mxu0
    %v165 = vadd.f32 0.0, %v164
    %v166 = vpop.f32.mrb[0].mxu0
    %167 = vmatprep.mubr.f32.mxu0 0.0
    %168 = vmatmul.mubr.f32.gmra.mrb[0].mxu0 %v46
    %v169 = vpop.f32.mrb[0].mxu0
    %v170 = vadd.f32 0.0, %v169
    %v171 = vpop.f32.mrb[0].mxu0
    %172 = vmatprep.mubr.f32.mxu0 0.0
    %173 = vmatmul.mubr.f32.gmra.mrb[0].mxu0 %v47
    %v174 = vpop.f32.mrb[0].mxu0
    %v175 = vadd.f32 0.0, %v174
    %v176 = vpop.f32.mrb[0].mxu0
    %177 = vmatprep.mubr.f32.mxu0 0.0
    %178 = vmatmul.mubr.f32.gmra.mrb[0].mxu0 %v48
    %v179 = vpop.f32.mrb[0].mxu0
    %v180 = vadd.f32 0.0, %v179
    %v181 = vpop.f32.mrb[0].mxu0
    %182 = vmatprep.mubr.f32.mxu0 0.0
    %183 = vmatmul.mubr.f32.gmra.mrb[0].mxu0 %v49
    %v184 = vpop.f32.mrb[0].mxu0
    %v185 = vadd.f32 0.0, %v184
    %v186 = vpop.f32.mrb[0].mxu0
    %187 = vmatprep.mubr.f32.mxu0 0.0
    %188 = vmatmul.mubr.f32.gmra.mrb[0].mxu0 %v50
    %v189 = vpop.f32.mrb[0].mxu0
    %v190 = vadd.f32 0.0, %v189
    %v191 = vpop.f32.mrb[0].mxu0
    %192 = vmatprep.mubr.f32.mxu0 0.0
    %193 = vmatmul.mubr.f32.gmra.mrb[0].mxu0 %v51
    %v194 = vpop.f32.mrb[0].mxu0
    %v195 = vadd.f32 0.0, %v194
    %v196 = vpop.f32.mrb[0].mxu0
    %197 = vdwg.mxu0
    %v198 = vld [vmem:[%s3] sm:$0xff]
    %v199 = vld [vmem:[%s3 + $0x8] sm:$0xff]
    %v200 = vld [vmem:[%s3 + $0x10] sm:$0xff]
    %v201 = vld [vmem:[%s3 + $0x18] sm:$0xff]
    %v202 = vld [vmem:[%s3 + $0x20] sm:$0x1]
    %v203 = vlaneseq
    %v204 = vshrl.u32 %v203, 7
    %v205 = vsub.s32 0, %v204
    %v206 = vrot.slane %v202, %v205
    %vm207 = vcmask 261120
    %v209 = vsel %vm207, %v120, 0
    %v212 = vsel %vm207, %v125, 0
    %v215 = vsel %vm207, %v130, 0
    %v218 = vsel %vm207, %v135, 0
    %v221 = vsel %vm207, %v140, 0
    %v224 = vsel %vm207, %v145, 0
    %v227 = vsel %vm207, %v150, 0
    %v230 = vsel %vm207, %v155, 0
    %v233 = vsel %vm207, %v160, 0
    %v236 = vsel %vm207, %v165, 0
    %v239 = vsel %vm207, %v170, 0
    %v242 = vsel %vm207, %v175, 0
    %v245 = vsel %vm207, %v180, 0
    %v248 = vsel %vm207, %v185, 0
    %v251 = vsel %vm207, %v190, 0
    %v254 = vsel %vm207, %v195, 0
    %256 = vmatprep.subr.mxu0 0.0
    %257 = vmatpush1.msra.mxu0 %v198
    %258 = vmatprep.subr.mxu0 0.0
    %259 = vmatpush1.msra.mxu0 %v199
    %260 = vmatprep.subr.mxu0 0.0
    %261 = vmatpush1.msra.mxu0 %v200
    %262 = vmatprep.subr.mxu0 0.0
    %263 = vmatpush1.msra.mxu0 %v201
    %264 = vmatprep.subr.mxu0 0.0
    %265 = vmatpush1.msra.mxu0 0.0
    %266 = vmatprep.subr.mxu0 0.0
    %267 = vmatpush1.msra.mxu0 0.0
    %268 = vmatprep.subr.mxu0 0.0
    %269 = vmatpush1.msra.mxu0 0.0
    %270 = vmatprep.subr.mxu0 0.0
    %271 = vmatpush1.msra.mxu0 0.0
    %272 = vmatprep.subr.mxu0 0.0
    %273 = vmatpush1.msra.mxu0 0.0
    %274 = vmatprep.subr.mxu0 0.0
    %275 = vmatpush1.msra.mxu0 0.0
    %276 = vmatprep.subr.mxu0 0.0
    %277 = vmatpush1.msra.mxu0 0.0
    %278 = vmatprep.subr.mxu0 0.0
    %279 = vmatpush1.msra.mxu0 0.0
    %280 = vmatprep.subr.mxu0 0.0
    %281 = vmatpush1.msra.mxu0 0.0
    %282 = vmatprep.subr.mxu0 0.0
    %283 = vmatpush1.msra.mxu0 0.0
    %284 = vmatprep.subr.mxu0 0.0
    %285 = vmatpush1.msra.mxu0 0.0
    %286 = vmatprep.subr.mxu0 0.0
    %287 = vmatpush1.msra.mxu0 0.0
    %288 = vmatprep.subr.mxu0 0.0
    %289 = vmatpush1.msra.mxu0 0.0
    %290 = vmatprep.subr.mxu0 0.0
    %291 = vmatpush1.msra.mxu0 0.0
    %292 = vmatprep.subr.mxu0 0.0
    %293 = vmatpush1.msra.mxu0 0.0
    %294 = vmatprep.subr.mxu0 0.0
    %295 = vmatpush1.msra.mxu0 0.0
    %296 = vmatprep.subr.mxu0 0.0
    %297 = vmatpush1.msra.mxu0 0.0
    %298 = vmatprep.subr.mxu0 0.0
    %299 = vmatpush1.msra.mxu0 0.0
    %300 = vmatprep.subr.mxu0 0.0
    %301 = vmatpush1.msra.mxu0 0.0
    %302 = vmatprep.subr.mxu0 0.0
    %303 = vmatpush1.msra.mxu0 0.0
    %304 = vmatprep.subr.mxu0 0.0
    %305 = vmatpush1.msra.mxu0 0.0
    %306 = vmatprep.subr.mxu0 0.0
    %307 = vmatpush1.msra.mxu0 0.0
    %308 = vmatprep.subr.mxu0 0.0
    %309 = vmatpush1.msra.mxu0 0.0
    %310 = vmatprep.subr.mxu0 0.0
    %311 = vmatpush1.msra.mxu0 0.0
    %312 = vmatprep.subr.mxu0 0.0
    %313 = vmatpush1.msra.mxu0 0.0
    %314 = vmatprep.subr.mxu0 0.0
    %315 = vmatpush1.msra.mxu0 0.0
    %316 = vmatprep.subr.mxu0 0.0
    %317 = vmatpush1.msra.mxu0 0.0
    %318 = vmatprep.subr.mxu0 0.0
    %319 = vmatpush1.msra.mxu0 0.0
    %320 = vmatprep.mubr.f32.mxu0 0.0
    %321 = vmatmul.mubr.f32.gmra.mrb[0].mxu0 %v209
    %v322 = vpop.f32.mrb[0].mxu0
    %v323 = vadd.f32 %v206, %v322
    %v324 = vpop.f32.mrb[0].mxu0
    %325 = vmatprep.mubr.f32.mxu0 0.0
    %326 = vmatmul.mubr.f32.gmra.mrb[0].mxu0 %v212
    %v327 = vpop.f32.mrb[0].mxu0
    %v328 = vadd.f32 %v206, %v327
    %v329 = vpop.f32.mrb[0].mxu0
    %330 = vmatprep.mubr.f32.mxu0 0.0
    %331 = vmatmul.mubr.f32.gmra.mrb[0].mxu0 %v215
    %v332 = vpop.f32.mrb[0].mxu0
    %v333 = vadd.f32 %v206, %v332
    %v334 = vpop.f32.mrb[0].mxu0
    %335 = vmatprep.mubr.f32.mxu0 0.0
    %336 = vmatmul.mubr.f32.gmra.mrb[0].mxu0 %v218
    %v337 = vpop.f32.mrb[0].mxu0
    %v338 = vadd.f32 %v206, %v337
    %v339 = vpop.f32.mrb[0].mxu0
    %340 = vmatprep.mubr.f32.mxu0 0.0
    %341 = vmatmul.mubr.f32.gmra.mrb[0].mxu0 %v221
    %v342 = vpop.f32.mrb[0].mxu0
    %v343 = vadd.f32 %v206, %v342
    %v344 = vpop.f32.mrb[0].mxu0
    %345 = vmatprep.mubr.f32.mxu0 0.0
    %346 = vmatmul.mubr.f32.gmra.mrb[0].mxu0 %v224
    %v347 = vpop.f32.mrb[0].mxu0
    %v348 = vadd.f32 %v206, %v347
    %v349 = vpop.f32.mrb[0].mxu0
    %350 = vmatprep.mubr.f32.mxu0 0.0
    %351 = vmatmul.mubr.f32.gmra.mrb[0].mxu0 %v227
    %v352 = vpop.f32.mrb[0].mxu0
    %v353 = vadd.f32 %v206, %v352
    %v354 = vpop.f32.mrb[0].mxu0
    %355 = vmatprep.mubr.f32.mxu0 0.0
    %356 = vmatmul.mubr.f32.gmra.mrb[0].mxu0 %v230
    %v357 = vpop.f32.mrb[0].mxu0
    %v358 = vadd.f32 %v206, %v357
    %v359 = vpop.f32.mrb[0].mxu0
    %360 = vmatprep.mubr.f32.mxu0 0.0
    %361 = vmatmul.mubr.f32.gmra.mrb[0].mxu0 %v233
    %v362 = vpop.f32.mrb[0].mxu0
    %v363 = vadd.f32 %v206, %v362
    %v364 = vpop.f32.mrb[0].mxu0
    %365 = vmatprep.mubr.f32.mxu0 0.0
    %366 = vmatmul.mubr.f32.gmra.mrb[0].mxu0 %v236
    %v367 = vpop.f32.mrb[0].mxu0
    %v368 = vadd.f32 %v206, %v367
    %v369 = vpop.f32.mrb[0].mxu0
    %370 = vmatprep.mubr.f32.mxu0 0.0
    %371 = vmatmul.mubr.f32.gmra.mrb[0].mxu0 %v239
    %v372 = vpop.f32.mrb[0].mxu0
    %v373 = vadd.f32 %v206, %v372
    %v374 = vpop.f32.mrb[0].mxu0
    %375 = vmatprep.mubr.f32.mxu0 0.0
    %376 = vmatmul.mubr.f32.gmra.mrb[0].mxu0 %v242
    %v377 = vpop.f32.mrb[0].mxu0
    %v378 = vadd.f32 %v206, %v377
    %v379 = vpop.f32.mrb[0].mxu0
    %380 = vmatprep.mubr.f32.mxu0 0.0
    %381 = vmatmul.mubr.f32.gmra.mrb[0].mxu0 %v245
    %v382 = vpop.f32.mrb[0].mxu0
    %v383 = vadd.f32 %v206, %v382
    %v384 = vpop.f32.mrb[0].mxu0
    %385 = vmatprep.mubr.f32.mxu0 0.0
    %386 = vmatmul.mubr.f32.gmra.mrb[0].mxu0 %v248
    %v387 = vpop.f32.mrb[0].mxu0
    %v388 = vadd.f32 %v206, %v387
    %v389 = vpop.f32.mrb[0].mxu0
    %390 = vmatprep.mubr.f32.mxu0 0.0
    %391 = vmatmul.mubr.f32.gmra.mrb[0].mxu0 %v251
    %v392 = vpop.f32.mrb[0].mxu0
    %v393 = vadd.f32 %v206, %v392
    %v394 = vpop.f32.mrb[0].mxu0
    %395 = vmatprep.mubr.f32.mxu0 0.0
    %396 = vmatmul.mubr.f32.gmra.mrb[0].mxu0 %v254
    %v397 = vpop.f32.mrb[0].mxu0
    %v398 = vadd.f32 %v206, %v397
    %v399 = vpop.f32.mrb[0].mxu0
    %400 = vdwg.mxu0
    %v401 = vmax.f32 %v323, 0.0
    %v402 = vmax.f32 %v328, 0.0
    %v403 = vmax.f32 %v333, 0.0
    %v404 = vmax.f32 %v338, 0.0
    %v405 = vmax.f32 %v343, 0.0
    %v406 = vmax.f32 %v348, 0.0
    %v407 = vmax.f32 %v353, 0.0
    %v408 = vmax.f32 %v358, 0.0
    %v409 = vmax.f32 %v363, 0.0
    %v410 = vmax.f32 %v368, 0.0
    %v411 = vmax.f32 %v373, 0.0
    %v412 = vmax.f32 %v378, 0.0
    %v413 = vmax.f32 %v383, 0.0
    %v414 = vmax.f32 %v388, 0.0
    %v415 = vmax.f32 %v393, 0.0
    %v416 = vmax.f32 %v398, 0.0
    %417 = vmatprep.subr.mxu0 0.0
    %418 = vmatpush1.msra.mxu0 %v401
    %419 = vmatprep.subr.mxu0 0.0
    %420 = vmatpush1.msra.mxu0 %v402
    %421 = vmatprep.subr.mxu0 0.0
    %422 = vmatpush1.msra.mxu0 %v403
    %423 = vmatprep.subr.mxu0 0.0
    %424 = vmatpush1.msra.mxu0 %v404
    %425 = vmatprep.subr.mxu0 0.0
    %426 = vmatpush1.msra.mxu0 %v405
    %427 = vmatprep.subr.mxu0 0.0
    %428 = vmatpush1.msra.mxu0 %v406
    %429 = vmatprep.subr.mxu0 0.0
    %430 = vmatpush1.msra.mxu0 %v407
    %431 = vmatprep.subr.mxu0 0.0
    %432 = vmatpush1.msra.mxu0 %v408
    %433 = vmatprep.subr.mxu0 0.0
    %434 = vmatpush1.msra.mxu0 %v409
    %435 = vmatprep.subr.mxu0 0.0
    %436 = vmatpush1.msra.mxu0 %v410
    %437 = vmatprep.subr.mxu0 0.0
    %438 = vmatpush1.msra.mxu0 %v411
    %439 = vmatprep.subr.mxu0 0.0
    %440 = vmatpush1.msra.mxu0 %v412
    %441 = vmatprep.subr.mxu0 0.0
    %442 = vmatpush1.msra.mxu0 %v413
    %443 = vmatprep.subr.mxu0 0.0
    %444 = vmatpush1.msra.mxu0 %v414
    %445 = vmatprep.subr.mxu0 0.0
    %446 = vmatpush1.msra.mxu0 %v415
    %447 = vmatprep.subr.mxu0 0.0
    %448 = vmatpush1.msra.mxu0 %v416
    %449 = vmatprep.subr.mxu0 0.0
    %450 = vmatpush1.msra.mxu0 0.0
    %451 = vmatprep.subr.mxu0 0.0
    %452 = vmatpush1.msra.mxu0 0.0
    %453 = vmatprep.subr.mxu0 0.0
    %454 = vmatpush1.msra.mxu0 0.0
    %455 = vmatprep.subr.mxu0 0.0
    %456 = vmatpush1.msra.mxu0 0.0
    %457 = vmatprep.subr.mxu0 0.0
    %458 = vmatpush1.msra.mxu0 0.0
    %459 = vmatprep.subr.mxu0 0.0
    %460 = vmatpush1.msra.mxu0 0.0
    %461 = vmatprep.subr.mxu0 0.0
    %462 = vmatpush1.msra.mxu0 0.0
    %463 = vmatprep.subr.mxu0 0.0
    %464 = vmatpush1.msra.mxu0 0.0
    %465 = vmatprep.subr.mxu0 0.0
    %466 = vmatpush1.msra.mxu0 0.0
    %467 = vmatprep.subr.mxu0 0.0
    %468 = vmatpush1.msra.mxu0 0.0
    %469 = vmatprep.subr.mxu0 0.0
    %470 = vmatpush1.msra.mxu0 0.0
    %471 = vmatprep.subr.mxu0 0.0
    %472 = vmatpush1.msra.mxu0 0.0
    %473 = vmatprep.subr.mxu0 0.0
    %474 = vmatpush1.msra.mxu0 0.0
    %475 = vmatprep.subr.mxu0 0.0
    %476 = vmatpush1.msra.mxu0 0.0
    %477 = vmatprep.subr.mxu0 0.0
    %478 = vmatpush1.msra.mxu0 0.0
    %479 = vmatprep.subr.mxu0 0.0
    %480 = vmatpush1.msra.mxu0 0.0
    %481 = vmatprep.mubr.f32.mxu0 0.0
    %482 = vmatmul.mubr.f32.gmra.mrb[0].mxu0 %v36
    %v483 = vpop.f32.mrb[0].mxu0
    %v484 = vadd.f32 0.0, %v483
    %v485 = vpop.f32.mrb[0].mxu0
    %486 = vmatprep.mubr.f32.mxu0 0.0
    %487 = vmatmul.mubr.f32.gmra.mrb[0].mxu0 %v37
    %v488 = vpop.f32.mrb[0].mxu0
    %v489 = vadd.f32 0.0, %v488
    %v490 = vpop.f32.mrb[0].mxu0
    %491 = vmatprep.mubr.f32.mxu0 0.0
    %492 = vmatmul.mubr.f32.gmra.mrb[0].mxu0 %v38
    %v493 = vpop.f32.mrb[0].mxu0
    %v494 = vadd.f32 0.0, %v493
    %v495 = vpop.f32.mrb[0].mxu0
    %496 = vmatprep.mubr.f32.mxu0 0.0
    %497 = vmatmul.mubr.f32.gmra.mrb[0].mxu0 %v39
    %v498 = vpop.f32.mrb[0].mxu0
    %v499 = vadd.f32 0.0, %v498
    %v500 = vpop.f32.mrb[0].mxu0
    %501 = vmatprep.mubr.f32.mxu0 0.0
    %502 = vmatmul.mubr.f32.gmra.mrb[0].mxu0 %v40
    %v503 = vpop.f32.mrb[0].mxu0
    %v504 = vadd.f32 0.0, %v503
    %v505 = vpop.f32.mrb[0].mxu0
    %506 = vmatprep.mubr.f32.mxu0 0.0
    %507 = vmatmul.mubr.f32.gmra.mrb[0].mxu0 %v41
    %v508 = vpop.f32.mrb[0].mxu0
    %v509 = vadd.f32 0.0, %v508
    %v510 = vpop.f32.mrb[0].mxu0
    %511 = vmatprep.mubr.f32.mxu0 0.0
    %512 = vmatmul.mubr.f32.gmra.mrb[0].mxu0 %v42
    %v513 = vpop.f32.mrb[0].mxu0
    %v514 = vadd.f32 0.0, %v513
    %v515 = vpop.f32.mrb[0].mxu0
    %516 = vmatprep.mubr.f32.mxu0 0.0
    %517 = vmatmul.mubr.f32.gmra.mrb[0].mxu0 %v43
    %v518 = vpop.f32.mrb[0].mxu0
    %v519 = vadd.f32 0.0, %v518
    %v520 = vpop.f32.mrb[0].mxu0
    %521 = vmatprep.mubr.f32.mxu0 0.0
    %522 = vmatmul.mubr.f32.gmra.mrb[0].mxu0 %v44
    %v523 = vpop.f32.mrb[0].mxu0
    %v524 = vadd.f32 0.0, %v523
    %v525 = vpop.f32.mrb[0].mxu0
    %526 = vmatprep.mubr.f32.mxu0 0.0
    %527 = vmatmul.mubr.f32.gmra.mrb[0].mxu0 %v45
    %v528 = vpop.f32.mrb[0].mxu0
    %v529 = vadd.f32 0.0, %v528
    %v530 = vpop.f32.mrb[0].mxu0
    %531 = vmatprep.mubr.f32.mxu0 0.0
    %532 = vmatmul.mubr.f32.gmra.mrb[0].mxu0 %v46
    %v533 = vpop.f32.mrb[0].mxu0
    %v534 = vadd.f32 0.0, %v533
    %v535 = vpop.f32.mrb[0].mxu0
    %536 = vmatprep.mubr.f32.mxu0 0.0
    %537 = vmatmul.mubr.f32.gmra.mrb[0].mxu0 %v47
    %v538 = vpop.f32.mrb[0].mxu0
    %v539 = vadd.f32 0.0, %v538
    %v540 = vpop.f32.mrb[0].mxu0
    %541 = vmatprep.mubr.f32.mxu0 0.0
    %542 = vmatmul.mubr.f32.gmra.mrb[0].mxu0 %v48
    %v543 = vpop.f32.mrb[0].mxu0
    %v544 = vadd.f32 0.0, %v543
    %v545 = vpop.f32.mrb[0].mxu0
    %546 = vmatprep.mubr.f32.mxu0 0.0
    %547 = vmatmul.mubr.f32.gmra.mrb[0].mxu0 %v49
    %v548 = vpop.f32.mrb[0].mxu0
    %v549 = vadd.f32 0.0, %v548
    %v550 = vpop.f32.mrb[0].mxu0
    %551 = vmatprep.mubr.f32.mxu0 0.0
    %552 = vmatmul.mubr.f32.gmra.mrb[0].mxu0 %v50
    %v553 = vpop.f32.mrb[0].mxu0
    %v554 = vadd.f32 0.0, %v553
    %v555 = vpop.f32.mrb[0].mxu0
    %556 = vmatprep.mubr.f32.mxu0 0.0
    %557 = vmatmul.mubr.f32.gmra.mrb[0].mxu0 %v51
    %v558 = vpop.f32.mrb[0].mxu0
    %v559 = vadd.f32 0.0, %v558
    %v560 = vpop.f32.mrb[0].mxu0
    %561 = vdwg.mxu0
    %v562 = vld [vmem:[%s3 + $0x28] sm:$0xff]
    %v563 = vld [vmem:[%s3 + $0x30] sm:$0xff]
    %v564 = vld [vmem:[%s3 + $0x38] sm:$0xff]
    %v565 = vld [vmem:[%s3 + $0x40] sm:$0xff]
    %v566 = vld [vmem:[%s3 + $0x48] sm:$0x1]
    %v567 = vlaneseq
    %v568 = vshrl.u32 %v567, 7
    %v569 = vsub.s32 0, %v568
    %v570 = vrot.slane %v566, %v569
    %v572 = vsel %vm207, %v484, 0
    %v575 = vsel %vm207, %v489, 0
    %v578 = vsel %vm207, %v494, 0
    %v581 = vsel %vm207, %v499, 0
    %v584 = vsel %vm207, %v504, 0
    %v587 = vsel %vm207, %v509, 0
    %v590 = vsel %vm207, %v514, 0
    %v593 = vsel %vm207, %v519, 0
    %v596 = vsel %vm207, %v524, 0
    %v599 = vsel %vm207, %v529, 0
    %v602 = vsel %vm207, %v534, 0
    %v605 = vsel %vm207, %v539, 0
    %v608 = vsel %vm207, %v544, 0
    %v611 = vsel %vm207, %v549, 0
    %v614 = vsel %vm207, %v554, 0
    %v617 = vsel %vm207, %v559, 0
    %619 = vmatprep.subr.mxu0 0.0
    %620 = vmatpush1.msra.mxu0 %v562
    %621 = vmatprep.subr.mxu0 0.0
    %622 = vmatpush1.msra.mxu0 %v563
    %623 = vmatprep.subr.mxu0 0.0
    %624 = vmatpush1.msra.mxu0 %v564
    %625 = vmatprep.subr.mxu0 0.0
    %626 = vmatpush1.msra.mxu0 %v565
    %627 = vmatprep.subr.mxu0 0.0
    %628 = vmatpush1.msra.mxu0 0.0
    %629 = vmatprep.subr.mxu0 0.0
    %630 = vmatpush1.msra.mxu0 0.0
    %631 = vmatprep.subr.mxu0 0.0
    %632 = vmatpush1.msra.mxu0 0.0
    %633 = vmatprep.subr.mxu0 0.0
    %634 = vmatpush1.msra.mxu0 0.0
    %635 = vmatprep.subr.mxu0 0.0
    %636 = vmatpush1.msra.mxu0 0.0
    %637 = vmatprep.subr.mxu0 0.0
    %638 = vmatpush1.msra.mxu0 0.0
    %639 = vmatprep.subr.mxu0 0.0
    %640 = vmatpush1.msra.mxu0 0.0
    %641 = vmatprep.subr.mxu0 0.0
    %642 = vmatpush1.msra.mxu0 0.0
    %643 = vmatprep.subr.mxu0 0.0
    %644 = vmatpush1.msra.mxu0 0.0
    %645 = vmatprep.subr.mxu0 0.0
    %646 = vmatpush1.msra.mxu0 0.0
    %647 = vmatprep.subr.mxu0 0.0
    %648 = vmatpush1.msra.mxu0 0.0
    %649 = vmatprep.subr.mxu0 0.0
    %650 = vmatpush1.msra.mxu0 0.0
    %651 = vmatprep.subr.mxu0 0.0
    %652 = vmatpush1.msra.mxu0 0.0
    %653 = vmatprep.subr.mxu0 0.0
    %654 = vmatpush1.msra.mxu0 0.0
    %655 = vmatprep.subr.mxu0 0.0
    %656 = vmatpush1.msra.mxu0 0.0
    %657 = vmatprep.subr.mxu0 0.0
    %658 = vmatpush1.msra.mxu0 0.0
    %659 = vmatprep.subr.mxu0 0.0
    %660 = vmatpush1.msra.mxu0 0.0
    %661 = vmatprep.subr.mxu0 0.0
    %662 = vmatpush1.msra.mxu0 0.0
    %663 = vmatprep.subr.mxu0 0.0
    %664 = vmatpush1.msra.mxu0 0.0
    %665 = vmatprep.subr.mxu0 0.0
    %666 = vmatpush1.msra.mxu0 0.0
    %667 = vmatprep.subr.mxu0 0.0
    %668 = vmatpush1.msra.mxu0 0.0
    %669 = vmatprep.subr.mxu0 0.0
    %670 = vmatpush1.msra.mxu0 0.0
    %671 = vmatprep.subr.mxu0 0.0
    %672 = vmatpush1.msra.mxu0 0.0
    %673 = vmatprep.subr.mxu0 0.0
    %674 = vmatpush1.msra.mxu0 0.0
    %675 = vmatprep.subr.mxu0 0.0
    %676 = vmatpush1.msra.mxu0 0.0
    %677 = vmatprep.subr.mxu0 0.0
    %678 = vmatpush1.msra.mxu0 0.0
    %679 = vmatprep.subr.mxu0 0.0
    %680 = vmatpush1.msra.mxu0 0.0
    %681 = vmatprep.subr.mxu0 0.0
    %682 = vmatpush1.msra.mxu0 0.0
    %683 = vmatprep.mubr.f32.mxu0 0.0
    %684 = vmatmul.mubr.f32.gmra.mrb[0].mxu0 %v572
    %v685 = vpop.f32.mrb[0].mxu0
    %v686 = vadd.f32 %v570, %v685
    %v687 = vpop.f32.mrb[0].mxu0
    %688 = vmatprep.mubr.f32.mxu0 0.0
    %689 = vmatmul.mubr.f32.gmra.mrb[0].mxu0 %v575
    %v690 = vpop.f32.mrb[0].mxu0
    %v691 = vadd.f32 %v570, %v690
    %v692 = vpop.f32.mrb[0].mxu0
    %693 = vmatprep.mubr.f32.mxu0 0.0
    %694 = vmatmul.mubr.f32.gmra.mrb[0].mxu0 %v578
    %v695 = vpop.f32.mrb[0].mxu0
    %v696 = vadd.f32 %v570, %v695
    %v697 = vpop.f32.mrb[0].mxu0
    %698 = vmatprep.mubr.f32.mxu0 0.0
    %699 = vmatmul.mubr.f32.gmra.mrb[0].mxu0 %v581
    %v700 = vpop.f32.mrb[0].mxu0
    %v701 = vadd.f32 %v570, %v700
    %v702 = vpop.f32.mrb[0].mxu0
    %703 = vmatprep.mubr.f32.mxu0 0.0
    %704 = vmatmul.mubr.f32.gmra.mrb[0].mxu0 %v584
    %v705 = vpop.f32.mrb[0].mxu0
    %v706 = vadd.f32 %v570, %v705
    %v707 = vpop.f32.mrb[0].mxu0
    %708 = vmatprep.mubr.f32.mxu0 0.0
    %709 = vmatmul.mubr.f32.gmra.mrb[0].mxu0 %v587
    %v710 = vpop.f32.mrb[0].mxu0
    %v711 = vadd.f32 %v570, %v710
    %v712 = vpop.f32.mrb[0].mxu0
    %713 = vmatprep.mubr.f32.mxu0 0.0
    %714 = vmatmul.mubr.f32.gmra.mrb[0].mxu0 %v590
    %v715 = vpop.f32.mrb[0].mxu0
    %v716 = vadd.f32 %v570, %v715
    %v717 = vpop.f32.mrb[0].mxu0
    %718 = vmatprep.mubr.f32.mxu0 0.0
    %719 = vmatmul.mubr.f32.gmra.mrb[0].mxu0 %v593
    %v720 = vpop.f32.mrb[0].mxu0
    %v721 = vadd.f32 %v570, %v720
    %v722 = vpop.f32.mrb[0].mxu0
    %723 = vmatprep.mubr.f32.mxu0 0.0
    %724 = vmatmul.mubr.f32.gmra.mrb[0].mxu0 %v596
    %v725 = vpop.f32.mrb[0].mxu0
    %v726 = vadd.f32 %v570, %v725
    %v727 = vpop.f32.mrb[0].mxu0
    %728 = vmatprep.mubr.f32.mxu0 0.0
    %729 = vmatmul.mubr.f32.gmra.mrb[0].mxu0 %v599
    %v730 = vpop.f32.mrb[0].mxu0
    %v731 = vadd.f32 %v570, %v730
    %v732 = vpop.f32.mrb[0].mxu0
    %733 = vmatprep.mubr.f32.mxu0 0.0
    %734 = vmatmul.mubr.f32.gmra.mrb[0].mxu0 %v602
    %v735 = vpop.f32.mrb[0].mxu0
    %v736 = vadd.f32 %v570, %v735
    %v737 = vpop.f32.mrb[0].mxu0
    %738 = vmatprep.mubr.f32.mxu0 0.0
    %739 = vmatmul.mubr.f32.gmra.mrb[0].mxu0 %v605
    %v740 = vpop.f32.mrb[0].mxu0
    %v741 = vadd.f32 %v570, %v740
    %v742 = vpop.f32.mrb[0].mxu0
    %743 = vmatprep.mubr.f32.mxu0 0.0
    %744 = vmatmul.mubr.f32.gmra.mrb[0].mxu0 %v608
    %v745 = vpop.f32.mrb[0].mxu0
    %v746 = vadd.f32 %v570, %v745
    %v747 = vpop.f32.mrb[0].mxu0
    %748 = vmatprep.mubr.f32.mxu0 0.0
    %749 = vmatmul.mubr.f32.gmra.mrb[0].mxu0 %v611
    %v750 = vpop.f32.mrb[0].mxu0
    %v751 = vadd.f32 %v570, %v750
    %v752 = vpop.f32.mrb[0].mxu0
    %753 = vmatprep.mubr.f32.mxu0 0.0
    %754 = vmatmul.mubr.f32.gmra.mrb[0].mxu0 %v614
    %v755 = vpop.f32.mrb[0].mxu0
    %v756 = vadd.f32 %v570, %v755
    %v757 = vpop.f32.mrb[0].mxu0
    %758 = vmatprep.mubr.f32.mxu0 0.0
    %759 = vmatmul.mubr.f32.gmra.mrb[0].mxu0 %v617
    %v760 = vpop.f32.mrb[0].mxu0
    %v761 = vadd.f32 %v570, %v760
    %v762 = vpop.f32.mrb[0].mxu0
    %763 = vdwg.mxu0
    %v764 = vld [vmem:[%s3 + $0x50] sm:$0xff]
    %v765 = vld [vmem:[%s3 + $0x58] sm:$0xff]
    %v766 = vld [vmem:[%s3 + $0x60] sm:$0xff]
    %v767 = vld [vmem:[%s3 + $0x68] sm:$0xff]
    %v768 = vld [vmem:[%s3 + $0x70] sm:$0x1]
    %v769 = vlaneseq
    %v770 = vshrl.u32 %v769, 7
    %v771 = vsub.s32 0, %v770
    %v772 = vrot.slane %v768, %v771
    %v774 = vsel %vm207, %v686, 0
    %v777 = vsel %vm207, %v691, 0
    %v780 = vsel %vm207, %v696, 0
    %v783 = vsel %vm207, %v701, 0
    %v786 = vsel %vm207, %v706, 0
    %v789 = vsel %vm207, %v711, 0
    %v792 = vsel %vm207, %v716, 0
    %v795 = vsel %vm207, %v721, 0
    %v798 = vsel %vm207, %v726, 0
    %v801 = vsel %vm207, %v731, 0
    %v804 = vsel %vm207, %v736, 0
    %v807 = vsel %vm207, %v741, 0
    %v810 = vsel %vm207, %v746, 0
    %v813 = vsel %vm207, %v751, 0
    %v816 = vsel %vm207, %v756, 0
    %v819 = vsel %vm207, %v761, 0
    %821 = vmatprep.subr.mxu0 0.0
    %822 = vmatpush1.msra.mxu0 %v764
    %823 = vmatprep.subr.mxu0 0.0
    %824 = vmatpush1.msra.mxu0 %v765
    %825 = vmatprep.subr.mxu0 0.0
    %826 = vmatpush1.msra.mxu0 %v766
    %827 = vmatprep.subr.mxu0 0.0
    %828 = vmatpush1.msra.mxu0 %v767
    %829 = vmatprep.subr.mxu0 0.0
    %830 = vmatpush1.msra.mxu0 0.0
    %831 = vmatprep.subr.mxu0 0.0
    %832 = vmatpush1.msra.mxu0 0.0
    %833 = vmatprep.subr.mxu0 0.0
    %834 = vmatpush1.msra.mxu0 0.0
    %835 = vmatprep.subr.mxu0 0.0
    %836 = vmatpush1.msra.mxu0 0.0
    %837 = vmatprep.subr.mxu0 0.0
    %838 = vmatpush1.msra.mxu0 0.0
    %839 = vmatprep.subr.mxu0 0.0
    %840 = vmatpush1.msra.mxu0 0.0
    %841 = vmatprep.subr.mxu0 0.0
    %842 = vmatpush1.msra.mxu0 0.0
    %843 = vmatprep.subr.mxu0 0.0
    %844 = vmatpush1.msra.mxu0 0.0
    %845 = vmatprep.subr.mxu0 0.0
    %846 = vmatpush1.msra.mxu0 0.0
    %847 = vmatprep.subr.mxu0 0.0
    %848 = vmatpush1.msra.mxu0 0.0
    %849 = vmatprep.subr.mxu0 0.0
    %850 = vmatpush1.msra.mxu0 0.0
    %851 = vmatprep.subr.mxu0 0.0
    %852 = vmatpush1.msra.mxu0 0.0
    %853 = vmatprep.subr.mxu0 0.0
    %854 = vmatpush1.msra.mxu0 0.0
    %855 = vmatprep.subr.mxu0 0.0
    %856 = vmatpush1.msra.mxu0 0.0
    %857 = vmatprep.subr.mxu0 0.0
    %858 = vmatpush1.msra.mxu0 0.0
    %859 = vmatprep.subr.mxu0 0.0
    %860 = vmatpush1.msra.mxu0 0.0
    %861 = vmatprep.subr.mxu0 0.0
    %862 = vmatpush1.msra.mxu0 0.0
    %863 = vmatprep.subr.mxu0 0.0
    %864 = vmatpush1.msra.mxu0 0.0
    %865 = vmatprep.subr.mxu0 0.0
    %866 = vmatpush1.msra.mxu0 0.0
    %867 = vmatprep.subr.mxu0 0.0
    %868 = vmatpush1.msra.mxu0 0.0
    %869 = vmatprep.subr.mxu0 0.0
    %870 = vmatpush1.msra.mxu0 0.0
    %871 = vmatprep.subr.mxu0 0.0
    %872 = vmatpush1.msra.mxu0 0.0
    %873 = vmatprep.subr.mxu0 0.0
    %874 = vmatpush1.msra.mxu0 0.0
    %875 = vmatprep.subr.mxu0 0.0
    %876 = vmatpush1.msra.mxu0 0.0
    %877 = vmatprep.subr.mxu0 0.0
    %878 = vmatpush1.msra.mxu0 0.0
    %879 = vmatprep.subr.mxu0 0.0
    %880 = vmatpush1.msra.mxu0 0.0
    %881 = vmatprep.subr.mxu0 0.0
    %882 = vmatpush1.msra.mxu0 0.0
    %883 = vmatprep.subr.mxu0 0.0
    %884 = vmatpush1.msra.mxu0 0.0
    %885 = vmatprep.mubr.f32.mxu0 0.0
    %886 = vmatmul.mubr.f32.gmra.mrb[0].mxu0 %v774
    %v887 = vpop.f32.mrb[0].mxu0
    %v888 = vadd.f32 %v772, %v887
    %v889 = vpop.f32.mrb[0].mxu0
    %890 = vmatprep.mubr.f32.mxu0 0.0
    %891 = vmatmul.mubr.f32.gmra.mrb[0].mxu0 %v777
    %v892 = vpop.f32.mrb[0].mxu0
    %v893 = vadd.f32 %v772, %v892
    %v894 = vpop.f32.mrb[0].mxu0
    %895 = vmatprep.mubr.f32.mxu0 0.0
    %896 = vmatmul.mubr.f32.gmra.mrb[0].mxu0 %v780
    %v897 = vpop.f32.mrb[0].mxu0
    %v898 = vadd.f32 %v772, %v897
    %v899 = vpop.f32.mrb[0].mxu0
    %900 = vmatprep.mubr.f32.mxu0 0.0
    %901 = vmatmul.mubr.f32.gmra.mrb[0].mxu0 %v783
    %v902 = vpop.f32.mrb[0].mxu0
    %v903 = vadd.f32 %v772, %v902
    %v904 = vpop.f32.mrb[0].mxu0
    %905 = vmatprep.mubr.f32.mxu0 0.0
    %906 = vmatmul.mubr.f32.gmra.mrb[0].mxu0 %v786
    %v907 = vpop.f32.mrb[0].mxu0
    %v908 = vadd.f32 %v772, %v907
    %v909 = vpop.f32.mrb[0].mxu0
    %910 = vmatprep.mubr.f32.mxu0 0.0
    %911 = vmatmul.mubr.f32.gmra.mrb[0].mxu0 %v789
    %v912 = vpop.f32.mrb[0].mxu0
    %v913 = vadd.f32 %v772, %v912
    %v914 = vpop.f32.mrb[0].mxu0
    %915 = vmatprep.mubr.f32.mxu0 0.0
    %916 = vmatmul.mubr.f32.gmra.mrb[0].mxu0 %v792
    %v917 = vpop.f32.mrb[0].mxu0
    %v918 = vadd.f32 %v772, %v917
    %v919 = vpop.f32.mrb[0].mxu0
    %920 = vmatprep.mubr.f32.mxu0 0.0
    %921 = vmatmul.mubr.f32.gmra.mrb[0].mxu0 %v795
    %v922 = vpop.f32.mrb[0].mxu0
    %v923 = vadd.f32 %v772, %v922
    %v924 = vpop.f32.mrb[0].mxu0
    %925 = vmatprep.mubr.f32.mxu0 0.0
    %926 = vmatmul.mubr.f32.gmra.mrb[0].mxu0 %v798
    %v927 = vpop.f32.mrb[0].mxu0
    %v928 = vadd.f32 %v772, %v927
    %v929 = vpop.f32.mrb[0].mxu0
    %930 = vmatprep.mubr.f32.mxu0 0.0
    %931 = vmatmul.mubr.f32.gmra.mrb[0].mxu0 %v801
    %v932 = vpop.f32.mrb[0].mxu0
    %v933 = vadd.f32 %v772, %v932
    %v934 = vpop.f32.mrb[0].mxu0
    %935 = vmatprep.mubr.f32.mxu0 0.0
    %936 = vmatmul.mubr.f32.gmra.mrb[0].mxu0 %v804
    %v937 = vpop.f32.mrb[0].mxu0
    %v938 = vadd.f32 %v772, %v937
    %v939 = vpop.f32.mrb[0].mxu0
    %940 = vmatprep.mubr.f32.mxu0 0.0
    %941 = vmatmul.mubr.f32.gmra.mrb[0].mxu0 %v807
    %v942 = vpop.f32.mrb[0].mxu0
    %v943 = vadd.f32 %v772, %v942
    %v944 = vpop.f32.mrb[0].mxu0
    %945 = vmatprep.mubr.f32.mxu0 0.0
    %946 = vmatmul.mubr.f32.gmra.mrb[0].mxu0 %v810
    %v947 = vpop.f32.mrb[0].mxu0
    %v948 = vadd.f32 %v772, %v947
    %v949 = vpop.f32.mrb[0].mxu0
    %950 = vmatprep.mubr.f32.mxu0 0.0
    %951 = vmatmul.mubr.f32.gmra.mrb[0].mxu0 %v813
    %v952 = vpop.f32.mrb[0].mxu0
    %v953 = vadd.f32 %v772, %v952
    %v954 = vpop.f32.mrb[0].mxu0
    %955 = vmatprep.mubr.f32.mxu0 0.0
    %956 = vmatmul.mubr.f32.gmra.mrb[0].mxu0 %v816
    %v957 = vpop.f32.mrb[0].mxu0
    %v958 = vadd.f32 %v772, %v957
    %v959 = vpop.f32.mrb[0].mxu0
    %960 = vmatprep.mubr.f32.mxu0 0.0
    %961 = vmatmul.mubr.f32.gmra.mrb[0].mxu0 %v819
    %v962 = vpop.f32.mrb[0].mxu0
    %v963 = vadd.f32 %v772, %v962
    %v964 = vpop.f32.mrb[0].mxu0
    %965 = vdwg.mxu0
    %v966 = vtanh.pop %v888
    %v967 = vtanh.pop %v893
    %v968 = vtanh.pop %v898
    %v969 = vtanh.pop %v903
    %v970 = vtanh.pop %v908
    %v971 = vtanh.pop %v913
    %v972 = vtanh.pop %v918
    %v973 = vtanh.pop %v923
    %v974 = vtanh.pop %v928
    %v975 = vtanh.pop %v933
    %v976 = vtanh.pop %v938
    %v977 = vtanh.pop %v943
    %v978 = vtanh.pop %v948
    %v979 = vtanh.pop %v953
    %v980 = vtanh.pop %v958
    %v981 = vtanh.pop %v963
    %v982 = vld [vmem:[%s3 + $0x78] sm:$0xff]
    %v983 = vld [vmem:[%s3 + $0x80] sm:$0xff]
    %v984 = vld [vmem:[%s3 + $0x88] sm:$0x1]
    %v985 = vlaneseq
    %v986 = vshrl.u32 %v985, 7
    %v987 = vsub.s32 0, %v986
    %v988 = vrot.slane %v984, %v987
    %vm989 = vcmask 130048
    %v991 = vsel %vm989, %v966, 0
    %v994 = vsel %vm989, %v967, 0
    %v997 = vsel %vm989, %v968, 0
    %v1000 = vsel %vm989, %v969, 0
    %v1003 = vsel %vm989, %v970, 0
    %v1006 = vsel %vm989, %v971, 0
    %v1009 = vsel %vm989, %v972, 0
    %v1012 = vsel %vm989, %v973, 0
    %v1015 = vsel %vm989, %v974, 0
    %v1018 = vsel %vm989, %v975, 0
    %v1021 = vsel %vm989, %v976, 0
    %v1024 = vsel %vm989, %v977, 0
    %v1027 = vsel %vm989, %v978, 0
    %v1030 = vsel %vm989, %v979, 0
    %v1033 = vsel %vm989, %v980, 0
    %v1036 = vsel %vm989, %v981, 0
    %1038 = vmatprep.subr.mxu0 0.0
    %1039 = vmatpush1.msra.mxu0 %v982
    %1040 = vmatprep.subr.mxu0 0.0
    %1041 = vmatpush1.msra.mxu0 %v983
    %1042 = vmatprep.subr.mxu0 0.0
    %1043 = vmatpush1.msra.mxu0 0.0
    %1044 = vmatprep.subr.mxu0 0.0
    %1045 = vmatpush1.msra.mxu0 0.0
    %1046 = vmatprep.subr.mxu0 0.0
    %1047 = vmatpush1.msra.mxu0 0.0
    %1048 = vmatprep.subr.mxu0 0.0
    %1049 = vmatpush1.msra.mxu0 0.0
    %1050 = vmatprep.subr.mxu0 0.0
    %1051 = vmatpush1.msra.mxu0 0.0
    %1052 = vmatprep.subr.mxu0 0.0
    %1053 = vmatpush1.msra.mxu0 0.0
    %1054 = vmatprep.subr.mxu0 0.0
    %1055 = vmatpush1.msra.mxu0 0.0
    %1056 = vmatprep.subr.mxu0 0.0
    %1057 = vmatpush1.msra.mxu0 0.0
    %1058 = vmatprep.subr.mxu0 0.0
    %1059 = vmatpush1.msra.mxu0 0.0
    %1060 = vmatprep.subr.mxu0 0.0
    %1061 = vmatpush1.msra.mxu0 0.0
    %1062 = vmatprep.subr.mxu0 0.0
    %1063 = vmatpush1.msra.mxu0 0.0
    %1064 = vmatprep.subr.mxu0 0.0
    %1065 = vmatpush1.msra.mxu0 0.0
    %1066 = vmatprep.subr.mxu0 0.0
    %1067 = vmatpush1.msra.mxu0 0.0
    %1068 = vmatprep.subr.mxu0 0.0
    %1069 = vmatpush1.msra.mxu0 0.0
    %1070 = vmatprep.subr.mxu0 0.0
    %1071 = vmatpush1.msra.mxu0 0.0
    %1072 = vmatprep.subr.mxu0 0.0
    %1073 = vmatpush1.msra.mxu0 0.0
    %1074 = vmatprep.subr.mxu0 0.0
    %1075 = vmatpush1.msra.mxu0 0.0
    %1076 = vmatprep.subr.mxu0 0.0
    %1077 = vmatpush1.msra.mxu0 0.0
    %1078 = vmatprep.subr.mxu0 0.0
    %1079 = vmatpush1.msra.mxu0 0.0
    %1080 = vmatprep.subr.mxu0 0.0
    %1081 = vmatpush1.msra.mxu0 0.0
    %1082 = vmatprep.subr.mxu0 0.0
    %1083 = vmatpush1.msra.mxu0 0.0
    %1084 = vmatprep.subr.mxu0 0.0
    %1085 = vmatpush1.msra.mxu0 0.0
    %1086 = vmatprep.subr.mxu0 0.0
    %1087 = vmatpush1.msra.mxu0 0.0
    %1088 = vmatprep.subr.mxu0 0.0
    %1089 = vmatpush1.msra.mxu0 0.0
    %1090 = vmatprep.subr.mxu0 0.0
    %1091 = vmatpush1.msra.mxu0 0.0
    %1092 = vmatprep.subr.mxu0 0.0
    %1093 = vmatpush1.msra.mxu0 0.0
    %1094 = vmatprep.subr.mxu0 0.0
    %1095 = vmatpush1.msra.mxu0 0.0
    %1096 = vmatprep.subr.mxu0 0.0
    %1097 = vmatpush1.msra.mxu0 0.0
    %1098 = vmatprep.subr.mxu0 0.0
    %1099 = vmatpush1.msra.mxu0 0.0
    %1100 = vmatprep.subr.mxu0 0.0
    %1101 = vmatpush1.msra.mxu0 0.0
    %1102 = vmatprep.mubr.f32.mxu0 0.0
    %1103 = vmatmul.mubr.f32.gmra.mrb[0].mxu0 %v991
    %v1104 = vpop.f32.mrb[0].mxu0
    %v1105 = vadd.f32 %v988, %v1104
    %v1106 = vpop.f32.mrb[0].mxu0
    %1107 = vmatprep.mubr.f32.mxu0 0.0
    %1108 = vmatmul.mubr.f32.gmra.mrb[0].mxu0 %v994
    %v1109 = vpop.f32.mrb[0].mxu0
    %v1110 = vadd.f32 %v988, %v1109
    %v1111 = vpop.f32.mrb[0].mxu0
    %1112 = vmatprep.mubr.f32.mxu0 0.0
    %1113 = vmatmul.mubr.f32.gmra.mrb[0].mxu0 %v997
    %v1114 = vpop.f32.mrb[0].mxu0
    %v1115 = vadd.f32 %v988, %v1114
    %v1116 = vpop.f32.mrb[0].mxu0
    %1117 = vmatprep.mubr.f32.mxu0 0.0
    %1118 = vmatmul.mubr.f32.gmra.mrb[0].mxu0 %v1000
    %v1119 = vpop.f32.mrb[0].mxu0
    %v1120 = vadd.f32 %v988, %v1119
    %v1121 = vpop.f32.mrb[0].mxu0
    %1122 = vmatprep.mubr.f32.mxu0 0.0
    %1123 = vmatmul.mubr.f32.gmra.mrb[0].mxu0 %v1003
    %v1124 = vpop.f32.mrb[0].mxu0
    %v1125 = vadd.f32 %v988, %v1124
    %v1126 = vpop.f32.mrb[0].mxu0
    %1127 = vmatprep.mubr.f32.mxu0 0.0
    %1128 = vmatmul.mubr.f32.gmra.mrb[0].mxu0 %v1006
    %v1129 = vpop.f32.mrb[0].mxu0
    %v1130 = vadd.f32 %v988, %v1129
    %v1131 = vpop.f32.mrb[0].mxu0
    %1132 = vmatprep.mubr.f32.mxu0 0.0
    %1133 = vmatmul.mubr.f32.gmra.mrb[0].mxu0 %v1009
    %v1134 = vpop.f32.mrb[0].mxu0
    %v1135 = vadd.f32 %v988, %v1134
    %v1136 = vpop.f32.mrb[0].mxu0
    %1137 = vmatprep.mubr.f32.mxu0 0.0
    %1138 = vmatmul.mubr.f32.gmra.mrb[0].mxu0 %v1012
    %v1139 = vpop.f32.mrb[0].mxu0
    %v1140 = vadd.f32 %v988, %v1139
    %v1141 = vpop.f32.mrb[0].mxu0
    %1142 = vmatprep.mubr.f32.mxu0 0.0
    %1143 = vmatmul.mubr.f32.gmra.mrb[0].mxu0 %v1015
    %v1144 = vpop.f32.mrb[0].mxu0
    %v1145 = vadd.f32 %v988, %v1144
    %v1146 = vpop.f32.mrb[0].mxu0
    %1147 = vmatprep.mubr.f32.mxu0 0.0
    %1148 = vmatmul.mubr.f32.gmra.mrb[0].mxu0 %v1018
    %v1149 = vpop.f32.mrb[0].mxu0
    %v1150 = vadd.f32 %v988, %v1149
    %v1151 = vpop.f32.mrb[0].mxu0
    %1152 = vmatprep.mubr.f32.mxu0 0.0
    %1153 = vmatmul.mubr.f32.gmra.mrb[0].mxu0 %v1021
    %v1154 = vpop.f32.mrb[0].mxu0
    %v1155 = vadd.f32 %v988, %v1154
    %v1156 = vpop.f32.mrb[0].mxu0
    %1157 = vmatprep.mubr.f32.mxu0 0.0
    %1158 = vmatmul.mubr.f32.gmra.mrb[0].mxu0 %v1024
    %v1159 = vpop.f32.mrb[0].mxu0
    %v1160 = vadd.f32 %v988, %v1159
    %v1161 = vpop.f32.mrb[0].mxu0
    %1162 = vmatprep.mubr.f32.mxu0 0.0
    %1163 = vmatmul.mubr.f32.gmra.mrb[0].mxu0 %v1027
    %v1164 = vpop.f32.mrb[0].mxu0
    %v1165 = vadd.f32 %v988, %v1164
    %v1166 = vpop.f32.mrb[0].mxu0
    %1167 = vmatprep.mubr.f32.mxu0 0.0
    %1168 = vmatmul.mubr.f32.gmra.mrb[0].mxu0 %v1030
    %v1169 = vpop.f32.mrb[0].mxu0
    %v1170 = vadd.f32 %v988, %v1169
    %v1171 = vpop.f32.mrb[0].mxu0
    %1172 = vmatprep.mubr.f32.mxu0 0.0
    %1173 = vmatmul.mubr.f32.gmra.mrb[0].mxu0 %v1033
    %v1174 = vpop.f32.mrb[0].mxu0
    %v1175 = vadd.f32 %v988, %v1174
    %v1176 = vpop.f32.mrb[0].mxu0
    %1177 = vmatprep.mubr.f32.mxu0 0.0
    %1178 = vmatmul.mubr.f32.gmra.mrb[0].mxu0 %v1036
    %v1179 = vpop.f32.mrb[0].mxu0
    %v1180 = vadd.f32 %v988, %v1179
    %v1181 = vpop.f32.mrb[0].mxu0
    %1182 = vdwg.mxu0
    %v1183 = vlaneseq
    %v1184 = vshrl.u32 %v1183, 7
    %v1185 = vadd.s32 %v1184, 8
    %v1186 = vadd.s32 %v1184, 16
    %v1187 = vadd.s32 %v1184, 24
    %v1188 = vadd.s32 %v1184, 32
    %v1189 = vadd.s32 %v1184, 40
    %v1190 = vadd.s32 %v1184, 48
    %v1191 = vadd.s32 %v1184, 56
    %v1192 = vadd.s32 %v1184, 64
    %v1193 = vadd.s32 %v1184, 72
    %v1194 = vadd.s32 %v1184, 80
    %v1195 = vadd.s32 %v1184, 88
    %v1196 = vadd.s32 %v1184, 96
    %v1197 = vadd.s32 %v1184, 104
    %v1198 = vadd.s32 %v1184, 112
    %v1199 = vadd.s32 %v1184, 120
    %v1200 = vlaneseq
    %v1201 = vand.u32 %v1200, 127
    %v1202 = vshra.s32 %v1201, 3
    %v1203 = vshra.s32 %v1184, 4
    %v1204 = vshra.s32 %v1185, 4
    %v1205 = vshra.s32 %v1186, 4
    %v1206 = vshra.s32 %v1187, 4
    %v1207 = vshra.s32 %v1188, 4
    %v1208 = vshra.s32 %v1189, 4
    %v1209 = vshra.s32 %v1190, 4
    %v1210 = vshra.s32 %v1191, 4
    %v1211 = vshra.s32 %v1192, 4
    %v1212 = vshra.s32 %v1193, 4
    %v1213 = vshra.s32 %v1194, 4
    %v1214 = vshra.s32 %v1195, 4
    %v1215 = vshra.s32 %v1196, 4
    %v1216 = vshra.s32 %v1197, 4
    %v1217 = vshra.s32 %v1198, 4
    %v1218 = vshra.s32 %v1199, 4
    %vm1219 = vcmp.eq.s32.totalorder %v1202, %v1203
    %vm1220 = vcmp.eq.s32.totalorder %v1202, %v1204
    %vm1221 = vcmp.eq.s32.totalorder %v1202, %v1205
    %vm1222 = vcmp.eq.s32.totalorder %v1202, %v1206
    %vm1223 = vcmp.eq.s32.totalorder %v1202, %v1207
    %vm1224 = vcmp.eq.s32.totalorder %v1202, %v1208
    %vm1225 = vcmp.eq.s32.totalorder %v1202, %v1209
    %vm1226 = vcmp.eq.s32.totalorder %v1202, %v1210
    %vm1227 = vcmp.eq.s32.totalorder %v1202, %v1211
    %vm1228 = vcmp.eq.s32.totalorder %v1202, %v1212
    %vm1229 = vcmp.eq.s32.totalorder %v1202, %v1213
    %vm1230 = vcmp.eq.s32.totalorder %v1202, %v1214
    %vm1231 = vcmp.eq.s32.totalorder %v1202, %v1215
    %vm1232 = vcmp.eq.s32.totalorder %v1202, %v1216
    %vm1233 = vcmp.eq.s32.totalorder %v1202, %v1217
    %vm1234 = vcmp.eq.s32.totalorder %v1202, %v1218
    %v1235 = vsel %vm1219, %v1105, -1e+30
    %v1236 = vsel %vm1220, %v1110, -1e+30
    %v1237 = vsel %vm1221, %v1115, -1e+30
    %v1238 = vsel %vm1222, %v1120, -1e+30
    %v1239 = vsel %vm1223, %v1125, -1e+30
    %v1240 = vsel %vm1224, %v1130, -1e+30
    %v1241 = vsel %vm1225, %v1135, -1e+30
    %v1242 = vsel %vm1226, %v1140, -1e+30
    %v1243 = vsel %vm1227, %v1145, -1e+30
    %v1244 = vsel %vm1228, %v1150, -1e+30
    %v1245 = vsel %vm1229, %v1155, -1e+30
    %v1246 = vsel %vm1230, %v1160, -1e+30
    %v1247 = vsel %vm1231, %v1165, -1e+30
    %v1248 = vsel %vm1232, %v1170, -1e+30
    %v1249 = vsel %vm1233, %v1175, -1e+30
    %v1250 = vsel %vm1234, %v1180, -1e+30
    %vm1251 = vcmask 523264
    %v1252 = vsel %vm1251, %v1235, -inf
    %v1253 = vsel %vm1251, %v1236, -inf
    %v1254 = vsel %vm1251, %v1237, -inf
    %v1255 = vsel %vm1251, %v1238, -inf
    %v1256 = vsel %vm1251, %v1239, -inf
    %v1257 = vmax.f32 %v1252, %v1256
    %v1258 = vsel %vm1251, %v1240, -inf
    %v1259 = vmax.f32 %v1253, %v1258
    %v1260 = vsel %vm1251, %v1241, -inf
    %v1261 = vmax.f32 %v1254, %v1260
    %v1262 = vsel %vm1251, %v1242, -inf
    %v1263 = vmax.f32 %v1255, %v1262
    %v1264 = vsel %vm1251, %v1243, -inf
    %v1265 = vmax.f32 %v1257, %v1264
    %v1266 = vsel %vm1251, %v1244, -inf
    %v1267 = vmax.f32 %v1259, %v1266
    %v1268 = vsel %vm1251, %v1245, -inf
    %v1269 = vmax.f32 %v1261, %v1268
    %v1270 = vsel %vm1251, %v1246, -inf
    %v1271 = vmax.f32 %v1263, %v1270
    %v1272 = vsel %vm1251, %v1247, -inf
    %v1273 = vmax.f32 %v1265, %v1272
    %v1274 = vsel %vm1251, %v1248, -inf
    %v1275 = vmax.f32 %v1267, %v1274
    %v1276 = vsel %vm1251, %v1249, -inf
    %v1277 = vmax.f32 %v1269, %v1276
    %v1278 = vsel %vm1251, %v1250, -inf
    %v1279 = vmax.f32 %v1271, %v1278
    %v1280 = vmax.f32 %v1273, %v1275
    %v1281 = vmax.f32 %v1277, %v1279
    %v1282 = vmax.f32 %v1280, %v1281
    %v1283 = vrot.slane %v1282, 4
    %v1284 = vmax.f32 %v1282, %v1283
    %v1285 = vrot.slane %v1284, 2
    %v1286 = vmax.f32 %v1284, %v1285
    %v1287 = vrot.slane %v1286, 1
    %v1288 = vmax.f32 %v1286, %v1287
    %v1289 = vsub.f32 %v1235, %v1288
    %v1290 = vsub.f32 %v1236, %v1288
    %v1291 = vsub.f32 %v1237, %v1288
    %v1292 = vsub.f32 %v1238, %v1288
    %v1293 = vsub.f32 %v1239, %v1288
    %v1294 = vsub.f32 %v1240, %v1288
    %v1295 = vsub.f32 %v1241, %v1288
    %v1296 = vsub.f32 %v1242, %v1288
    %v1297 = vsub.f32 %v1243, %v1288
    %v1298 = vsub.f32 %v1244, %v1288
    %v1299 = vsub.f32 %v1245, %v1288
    %v1300 = vsub.f32 %v1246, %v1288
    %v1301 = vsub.f32 %v1247, %v1288
    %v1302 = vsub.f32 %v1248, %v1288
    %v1303 = vsub.f32 %v1249, %v1288
    %v1304 = vsub.f32 %v1250, %v1288
    %v1305 = vmul.f32 %v1289, 1.442695
    %v1306 = vpow.pop %v1305
    %v1307 = vmul.f32 %v1290, 1.442695
    %v1308 = vpow.pop %v1307
    %v1309 = vmul.f32 %v1291, 1.442695
    %v1310 = vpow.pop %v1309
    %v1311 = vmul.f32 %v1292, 1.442695
    %v1312 = vpow.pop %v1311
    %v1313 = vmul.f32 %v1293, 1.442695
    %v1314 = vpow.pop %v1313
    %v1315 = vmul.f32 %v1294, 1.442695
    %v1316 = vpow.pop %v1315
    %v1317 = vmul.f32 %v1295, 1.442695
    %v1318 = vpow.pop %v1317
    %v1319 = vmul.f32 %v1296, 1.442695
    %v1320 = vpow.pop %v1319
    %v1321 = vmul.f32 %v1297, 1.442695
    %v1322 = vpow.pop %v1321
    %v1323 = vmul.f32 %v1298, 1.442695
    %v1324 = vpow.pop %v1323
    %v1325 = vmul.f32 %v1299, 1.442695
    %v1326 = vpow.pop %v1325
    %v1327 = vmul.f32 %v1300, 1.442695
    %v1328 = vpow.pop %v1327
    %v1329 = vmul.f32 %v1301, 1.442695
    %v1330 = vpow.pop %v1329
    %v1331 = vmul.f32 %v1302, 1.442695
    %v1332 = vpow.pop %v1331
    %v1333 = vmul.f32 %v1303, 1.442695
    %v1334 = vpow.pop %v1333
    %v1335 = vmul.f32 %v1304, 1.442695
    %v1336 = vpow.pop %v1335
    %v1337 = vsel %vm1251, %v1306, 0.0
    %v1338 = vsel %vm1251, %v1308, 0.0
    %v1339 = vadd.f32 %v1337, %v1338
    %v1340 = vsel %vm1251, %v1310, 0.0
    %v1341 = vadd.f32 %v1339, %v1340
    %v1342 = vsel %vm1251, %v1312, 0.0
    %v1343 = vadd.f32 %v1341, %v1342
    %v1344 = vsel %vm1251, %v1314, 0.0
    %v1345 = vadd.f32 %v1343, %v1344
    %v1346 = vsel %vm1251, %v1316, 0.0
    %v1347 = vadd.f32 %v1345, %v1346
    %v1348 = vsel %vm1251, %v1318, 0.0
    %v1349 = vadd.f32 %v1347, %v1348
    %v1350 = vsel %vm1251, %v1320, 0.0
    %v1351 = vadd.f32 %v1349, %v1350
    %v1352 = vsel %vm1251, %v1322, 0.0
    %v1353 = vadd.f32 %v1351, %v1352
    %v1354 = vsel %vm1251, %v1324, 0.0
    %v1355 = vadd.f32 %v1353, %v1354
    %v1356 = vsel %vm1251, %v1326, 0.0
    %v1357 = vadd.f32 %v1355, %v1356
    %v1358 = vsel %vm1251, %v1328, 0.0
    %v1359 = vadd.f32 %v1357, %v1358
    %v1360 = vsel %vm1251, %v1330, 0.0
    %v1361 = vadd.f32 %v1359, %v1360
    %v1362 = vsel %vm1251, %v1332, 0.0
    %v1363 = vadd.f32 %v1361, %v1362
    %v1364 = vsel %vm1251, %v1334, 0.0
    %v1365 = vadd.f32 %v1363, %v1364
    %v1366 = vsel %vm1251, %v1336, 0.0
    %v1367 = vadd.f32 %v1365, %v1366
    %v1368 = vrot.slane %v1367, 4
    %v1369 = vadd.f32 %v1367, %v1368
    %v1370 = vrot.slane %v1369, 2
    %v1371 = vadd.f32 %v1369, %v1370
    %v1372 = vrot.slane %v1371, 1
    %v1373 = vadd.f32 %v1371, %v1372
    %v1374 = vrcp.pop %v1373
    %v1375 = vmul.f32 %v1306, %v1374
    %v1376 = vmul.f32 %v1308, %v1374
    %v1377 = vmul.f32 %v1310, %v1374
    %v1378 = vmul.f32 %v1312, %v1374
    %v1379 = vmul.f32 %v1314, %v1374
    %v1380 = vmul.f32 %v1316, %v1374
    %v1381 = vmul.f32 %v1318, %v1374
    %v1382 = vmul.f32 %v1320, %v1374
    %v1383 = vmul.f32 %v1322, %v1374
    %v1384 = vmul.f32 %v1324, %v1374
    %v1385 = vmul.f32 %v1326, %v1374
    %v1386 = vmul.f32 %v1328, %v1374
    %v1387 = vmul.f32 %v1330, %v1374
    %v1388 = vmul.f32 %v1332, %v1374
    %v1389 = vmul.f32 %v1334, %v1374
    %v1390 = vmul.f32 %v1336, %v1374
    %v1391 = vshra.s32 %v1201, 4
    %v1392 = vand.u32 %v1184, 7
    %v1393 = vand.u32 %v1185, 7
    %v1394 = vand.u32 %v1186, 7
    %v1395 = vand.u32 %v1187, 7
    %v1396 = vand.u32 %v1188, 7
    %v1397 = vand.u32 %v1189, 7
    %v1398 = vand.u32 %v1190, 7
    %v1399 = vand.u32 %v1191, 7
    %vm1400 = vcmp.eq.s32.totalorder %v1391, %v1392
    %vm1401 = vcmp.eq.s32.totalorder %v1391, %v1393
    %vm1402 = vcmp.eq.s32.totalorder %v1391, %v1394
    %vm1403 = vcmp.eq.s32.totalorder %v1391, %v1395
    %vm1404 = vcmp.eq.s32.totalorder %v1391, %v1396
    %vm1405 = vcmp.eq.s32.totalorder %v1391, %v1397
    %vm1406 = vcmp.eq.s32.totalorder %v1391, %v1398
    %vm1407 = vcmp.eq.s32.totalorder %v1391, %v1399
    %v1408 = vsel %vm1400, 1, 0
    %v1409 = vsel %vm1401, 1, 0
    %v1410 = vsel %vm1402, 1, 0
    %v1411 = vsel %vm1403, 1, 0
    %v1412 = vsel %vm1404, 1, 0
    %v1413 = vsel %vm1405, 1, 0
    %v1414 = vsel %vm1406, 1, 0
    %v1415 = vsel %vm1407, 1, 0
    %v1416 = vcvt.s32.f32 %v1408
    %v1417 = vcvt.s32.f32 %v1409
    %v1418 = vcvt.s32.f32 %v1410
    %v1419 = vcvt.s32.f32 %v1411
    %v1420 = vcvt.s32.f32 %v1412
    %v1421 = vcvt.s32.f32 %v1413
    %v1422 = vcvt.s32.f32 %v1414
    %v1423 = vcvt.s32.f32 %v1415
    %v1424 = vand.u32 %v1201, 15
    %vm1425 = vcmp.eq.s32.totalorder %v1424, %v1184
    %vm1426 = vcmp.eq.s32.totalorder %v1424, %v1185
    %v1427 = vsel %vm1425, 1, 0
    %v1428 = vsel %vm1426, 1, 0
    %v1429 = vcvt.s32.f32 %v1427
    %v1430 = vcvt.s32.f32 %v1428
    %v1432 = vsel %vm1251, %v1375, 0
    %v1435 = vsel %vm1251, %v1376, 0
    %v1438 = vsel %vm1251, %v1377, 0
    %v1441 = vsel %vm1251, %v1378, 0
    %v1444 = vsel %vm1251, %v1379, 0
    %v1447 = vsel %vm1251, %v1380, 0
    %v1450 = vsel %vm1251, %v1381, 0
    %v1453 = vsel %vm1251, %v1382, 0
    %v1456 = vsel %vm1251, %v1383, 0
    %v1459 = vsel %vm1251, %v1384, 0
    %v1462 = vsel %vm1251, %v1385, 0
    %v1465 = vsel %vm1251, %v1386, 0
    %v1468 = vsel %vm1251, %v1387, 0
    %v1471 = vsel %vm1251, %v1388, 0
    %v1474 = vsel %vm1251, %v1389, 0
    %v1477 = vsel %vm1251, %v1390, 0
    %1479 = vmatprep.subr.mxu0 0.0
    %1480 = vmatpush1.msra.mxu0 %v1416
    %1481 = vmatprep.subr.mxu0 0.0
    %1482 = vmatpush1.msra.mxu0 %v1417
    %1483 = vmatprep.subr.mxu0 0.0
    %1484 = vmatpush1.msra.mxu0 %v1418
    %1485 = vmatprep.subr.mxu0 0.0
    %1486 = vmatpush1.msra.mxu0 %v1419
    %1487 = vmatprep.subr.mxu0 0.0
    %1488 = vmatpush1.msra.mxu0 %v1420
    %1489 = vmatprep.subr.mxu0 0.0
    %1490 = vmatpush1.msra.mxu0 %v1421
    %1491 = vmatprep.subr.mxu0 0.0
    %1492 = vmatpush1.msra.mxu0 %v1422
    %1493 = vmatprep.subr.mxu0 0.0
    %1494 = vmatpush1.msra.mxu0 %v1423
    %1495 = vmatprep.subr.mxu0 0.0
    %1496 = vmatpush1.msra.mxu0 0.0
    %1497 = vmatprep.subr.mxu0 0.0
    %1498 = vmatpush1.msra.mxu0 0.0
    %1499 = vmatprep.subr.mxu0 0.0
    %1500 = vmatpush1.msra.mxu0 0.0
    %1501 = vmatprep.subr.mxu0 0.0
    %1502 = vmatpush1.msra.mxu0 0.0
    %1503 = vmatprep.subr.mxu0 0.0
    %1504 = vmatpush1.msra.mxu0 0.0
    %1505 = vmatprep.subr.mxu0 0.0
    %1506 = vmatpush1.msra.mxu0 0.0
    %1507 = vmatprep.subr.mxu0 0.0
    %1508 = vmatpush1.msra.mxu0 0.0
    %1509 = vmatprep.subr.mxu0 0.0
    %1510 = vmatpush1.msra.mxu0 0.0
    %1511 = vmatprep.subr.mxu0 0.0
    %1512 = vmatpush1.msra.mxu0 0.0
    %1513 = vmatprep.subr.mxu0 0.0
    %1514 = vmatpush1.msra.mxu0 0.0
    %1515 = vmatprep.subr.mxu0 0.0
    %1516 = vmatpush1.msra.mxu0 0.0
    %1517 = vmatprep.subr.mxu0 0.0
    %1518 = vmatpush1.msra.mxu0 0.0
    %1519 = vmatprep.subr.mxu0 0.0
    %1520 = vmatpush1.msra.mxu0 0.0
    %1521 = vmatprep.subr.mxu0 0.0
    %1522 = vmatpush1.msra.mxu0 0.0
    %1523 = vmatprep.subr.mxu0 0.0
    %1524 = vmatpush1.msra.mxu0 0.0
    %1525 = vmatprep.subr.mxu0 0.0
    %1526 = vmatpush1.msra.mxu0 0.0
    %1527 = vmatprep.subr.mxu0 0.0
    %1528 = vmatpush1.msra.mxu0 0.0
    %1529 = vmatprep.subr.mxu0 0.0
    %1530 = vmatpush1.msra.mxu0 0.0
    %1531 = vmatprep.subr.mxu0 0.0
    %1532 = vmatpush1.msra.mxu0 0.0
    %1533 = vmatprep.subr.mxu0 0.0
    %1534 = vmatpush1.msra.mxu0 0.0
    %1535 = vmatprep.subr.mxu0 0.0
    %1536 = vmatpush1.msra.mxu0 0.0
    %1537 = vmatprep.subr.mxu0 0.0
    %1538 = vmatpush1.msra.mxu0 0.0
    %1539 = vmatprep.subr.mxu0 0.0
    %1540 = vmatpush1.msra.mxu0 0.0
    %1541 = vmatprep.subr.mxu0 0.0
    %1542 = vmatpush1.msra.mxu0 0.0
    %1543 = vmatprep.mubr.f32.mxu0 0.0
    %1544 = vmatmul.mubr.f32.gmra.mrb[0].mxu0 %v1432
    %v1545 = vpop.f32.mrb[0].mxu0
    %v1546 = vadd.f32 0.0, %v1545
    %v1547 = vpop.f32.mrb[0].mxu0
    %1548 = vmatprep.mubr.f32.mxu0 0.0
    %1549 = vmatmul.mubr.f32.gmra.mrb[0].mxu0 %v1435
    %v1550 = vpop.f32.mrb[0].mxu0
    %v1551 = vadd.f32 0.0, %v1550
    %v1552 = vpop.f32.mrb[0].mxu0
    %1553 = vmatprep.mubr.f32.mxu0 0.0
    %1554 = vmatmul.mubr.f32.gmra.mrb[0].mxu0 %v1438
    %v1555 = vpop.f32.mrb[0].mxu0
    %v1556 = vadd.f32 0.0, %v1555
    %v1557 = vpop.f32.mrb[0].mxu0
    %1558 = vmatprep.mubr.f32.mxu0 0.0
    %1559 = vmatmul.mubr.f32.gmra.mrb[0].mxu0 %v1441
    %v1560 = vpop.f32.mrb[0].mxu0
    %v1561 = vadd.f32 0.0, %v1560
    %v1562 = vpop.f32.mrb[0].mxu0
    %1563 = vmatprep.mubr.f32.mxu0 0.0
    %1564 = vmatmul.mubr.f32.gmra.mrb[0].mxu0 %v1444
    %v1565 = vpop.f32.mrb[0].mxu0
    %v1566 = vadd.f32 0.0, %v1565
    %v1567 = vpop.f32.mrb[0].mxu0
    %1568 = vmatprep.mubr.f32.mxu0 0.0
    %1569 = vmatmul.mubr.f32.gmra.mrb[0].mxu0 %v1447
    %v1570 = vpop.f32.mrb[0].mxu0
    %v1571 = vadd.f32 0.0, %v1570
    %v1572 = vpop.f32.mrb[0].mxu0
    %1573 = vmatprep.mubr.f32.mxu0 0.0
    %1574 = vmatmul.mubr.f32.gmra.mrb[0].mxu0 %v1450
    %v1575 = vpop.f32.mrb[0].mxu0
    %v1576 = vadd.f32 0.0, %v1575
    %v1577 = vpop.f32.mrb[0].mxu0
    %1578 = vmatprep.mubr.f32.mxu0 0.0
    %1579 = vmatmul.mubr.f32.gmra.mrb[0].mxu0 %v1453
    %v1580 = vpop.f32.mrb[0].mxu0
    %v1581 = vadd.f32 0.0, %v1580
    %v1582 = vpop.f32.mrb[0].mxu0
    %1583 = vmatprep.mubr.f32.mxu0 0.0
    %1584 = vmatmul.mubr.f32.gmra.mrb[0].mxu0 %v1456
    %v1585 = vpop.f32.mrb[0].mxu0
    %v1586 = vadd.f32 0.0, %v1585
    %v1587 = vpop.f32.mrb[0].mxu0
    %1588 = vmatprep.mubr.f32.mxu0 0.0
    %1589 = vmatmul.mubr.f32.gmra.mrb[0].mxu0 %v1459
    %v1590 = vpop.f32.mrb[0].mxu0
    %v1591 = vadd.f32 0.0, %v1590
    %v1592 = vpop.f32.mrb[0].mxu0
    %1593 = vmatprep.mubr.f32.mxu0 0.0
    %1594 = vmatmul.mubr.f32.gmra.mrb[0].mxu0 %v1462
    %v1595 = vpop.f32.mrb[0].mxu0
    %v1596 = vadd.f32 0.0, %v1595
    %v1597 = vpop.f32.mrb[0].mxu0
    %1598 = vmatprep.mubr.f32.mxu0 0.0
    %1599 = vmatmul.mubr.f32.gmra.mrb[0].mxu0 %v1465
    %v1600 = vpop.f32.mrb[0].mxu0
    %v1601 = vadd.f32 0.0, %v1600
    %v1602 = vpop.f32.mrb[0].mxu0
    %1603 = vmatprep.mubr.f32.mxu0 0.0
    %1604 = vmatmul.mubr.f32.gmra.mrb[0].mxu0 %v1468
    %v1605 = vpop.f32.mrb[0].mxu0
    %v1606 = vadd.f32 0.0, %v1605
    %v1607 = vpop.f32.mrb[0].mxu0
    %1608 = vmatprep.mubr.f32.mxu0 0.0
    %1609 = vmatmul.mubr.f32.gmra.mrb[0].mxu0 %v1471
    %v1610 = vpop.f32.mrb[0].mxu0
    %v1611 = vadd.f32 0.0, %v1610
    %v1612 = vpop.f32.mrb[0].mxu0
    %1613 = vmatprep.mubr.f32.mxu0 0.0
    %1614 = vmatmul.mubr.f32.gmra.mrb[0].mxu0 %v1474
    %v1615 = vpop.f32.mrb[0].mxu0
    %v1616 = vadd.f32 0.0, %v1615
    %v1617 = vpop.f32.mrb[0].mxu0
    %1618 = vmatprep.mubr.f32.mxu0 0.0
    %1619 = vmatmul.mubr.f32.gmra.mrb[0].mxu0 %v1477
    %v1620 = vpop.f32.mrb[0].mxu0
    %v1621 = vadd.f32 0.0, %v1620
    %v1622 = vpop.f32.mrb[0].mxu0
    %1623 = vdwg.mxu0
    %1624 = vmatprep.subr.mxu0 0.0
    %1625 = vmatpush1.msra.mxu0 %v1429
    %1626 = vmatprep.subr.mxu0 0.0
    %1627 = vmatpush1.msra.mxu0 %v1430
    %1628 = vmatprep.subr.mxu0 0.0
    %1629 = vmatpush1.msra.mxu0 0.0
    %1630 = vmatprep.subr.mxu0 0.0
    %1631 = vmatpush1.msra.mxu0 0.0
    %1632 = vmatprep.subr.mxu0 0.0
    %1633 = vmatpush1.msra.mxu0 0.0
    %1634 = vmatprep.subr.mxu0 0.0
    %1635 = vmatpush1.msra.mxu0 0.0
    %1636 = vmatprep.subr.mxu0 0.0
    %1637 = vmatpush1.msra.mxu0 0.0
    %1638 = vmatprep.subr.mxu0 0.0
    %1639 = vmatpush1.msra.mxu0 0.0
    %1640 = vmatprep.subr.mxu0 0.0
    %1641 = vmatpush1.msra.mxu0 0.0
    %1642 = vmatprep.subr.mxu0 0.0
    %1643 = vmatpush1.msra.mxu0 0.0
    %1644 = vmatprep.subr.mxu0 0.0
    %1645 = vmatpush1.msra.mxu0 0.0
    %1646 = vmatprep.subr.mxu0 0.0
    %1647 = vmatpush1.msra.mxu0 0.0
    %1648 = vmatprep.subr.mxu0 0.0
    %1649 = vmatpush1.msra.mxu0 0.0
    %1650 = vmatprep.subr.mxu0 0.0
    %1651 = vmatpush1.msra.mxu0 0.0
    %1652 = vmatprep.subr.mxu0 0.0
    %1653 = vmatpush1.msra.mxu0 0.0
    %1654 = vmatprep.subr.mxu0 0.0
    %1655 = vmatpush1.msra.mxu0 0.0
    %1656 = vmatprep.subr.mxu0 0.0
    %1657 = vmatpush1.msra.mxu0 0.0
    %1658 = vmatprep.subr.mxu0 0.0
    %1659 = vmatpush1.msra.mxu0 0.0
    %1660 = vmatprep.subr.mxu0 0.0
    %1661 = vmatpush1.msra.mxu0 0.0
    %1662 = vmatprep.subr.mxu0 0.0
    %1663 = vmatpush1.msra.mxu0 0.0
    %1664 = vmatprep.subr.mxu0 0.0
    %1665 = vmatpush1.msra.mxu0 0.0
    %1666 = vmatprep.subr.mxu0 0.0
    %1667 = vmatpush1.msra.mxu0 0.0
    %1668 = vmatprep.subr.mxu0 0.0
    %1669 = vmatpush1.msra.mxu0 0.0
    %1670 = vmatprep.subr.mxu0 0.0
    %1671 = vmatpush1.msra.mxu0 0.0
    %1672 = vmatprep.subr.mxu0 0.0
    %1673 = vmatpush1.msra.mxu0 0.0
    %1674 = vmatprep.subr.mxu0 0.0
    %1675 = vmatpush1.msra.mxu0 0.0
    %1676 = vmatprep.subr.mxu0 0.0
    %1677 = vmatpush1.msra.mxu0 0.0
    %1678 = vmatprep.subr.mxu0 0.0
    %1679 = vmatpush1.msra.mxu0 0.0
    %1680 = vmatprep.subr.mxu0 0.0
    %1681 = vmatpush1.msra.mxu0 0.0
    %1682 = vmatprep.subr.mxu0 0.0
    %1683 = vmatpush1.msra.mxu0 0.0
    %1684 = vmatprep.subr.mxu0 0.0
    %1685 = vmatpush1.msra.mxu0 0.0
    %1686 = vmatprep.subr.mxu0 0.0
    %1687 = vmatpush1.msra.mxu0 0.0
    %1688 = vmatprep.mubr.f32.mxu0 0.0
    %1689 = vmatmul.mubr.f32.gmra.mrb[0].mxu0 %v991
    %v1690 = vpop.f32.mrb[0].mxu0
    %v1691 = vadd.f32 0.0, %v1690
    %v1692 = vpop.f32.mrb[0].mxu0
    %1693 = vmatprep.mubr.f32.mxu0 0.0
    %1694 = vmatmul.mubr.f32.gmra.mrb[0].mxu0 %v994
    %v1695 = vpop.f32.mrb[0].mxu0
    %v1696 = vadd.f32 0.0, %v1695
    %v1697 = vpop.f32.mrb[0].mxu0
    %1698 = vmatprep.mubr.f32.mxu0 0.0
    %1699 = vmatmul.mubr.f32.gmra.mrb[0].mxu0 %v997
    %v1700 = vpop.f32.mrb[0].mxu0
    %v1701 = vadd.f32 0.0, %v1700
    %v1702 = vpop.f32.mrb[0].mxu0
    %1703 = vmatprep.mubr.f32.mxu0 0.0
    %1704 = vmatmul.mubr.f32.gmra.mrb[0].mxu0 %v1000
    %v1705 = vpop.f32.mrb[0].mxu0
    %v1706 = vadd.f32 0.0, %v1705
    %v1707 = vpop.f32.mrb[0].mxu0
    %1708 = vmatprep.mubr.f32.mxu0 0.0
    %1709 = vmatmul.mubr.f32.gmra.mrb[0].mxu0 %v1003
    %v1710 = vpop.f32.mrb[0].mxu0
    %v1711 = vadd.f32 0.0, %v1710
    %v1712 = vpop.f32.mrb[0].mxu0
    %1713 = vmatprep.mubr.f32.mxu0 0.0
    %1714 = vmatmul.mubr.f32.gmra.mrb[0].mxu0 %v1006
    %v1715 = vpop.f32.mrb[0].mxu0
    %v1716 = vadd.f32 0.0, %v1715
    %v1717 = vpop.f32.mrb[0].mxu0
    %1718 = vmatprep.mubr.f32.mxu0 0.0
    %1719 = vmatmul.mubr.f32.gmra.mrb[0].mxu0 %v1009
    %v1720 = vpop.f32.mrb[0].mxu0
    %v1721 = vadd.f32 0.0, %v1720
    %v1722 = vpop.f32.mrb[0].mxu0
    %1723 = vmatprep.mubr.f32.mxu0 0.0
    %1724 = vmatmul.mubr.f32.gmra.mrb[0].mxu0 %v1012
    %v1725 = vpop.f32.mrb[0].mxu0
    %v1726 = vadd.f32 0.0, %v1725
    %v1727 = vpop.f32.mrb[0].mxu0
    %1728 = vmatprep.mubr.f32.mxu0 0.0
    %1729 = vmatmul.mubr.f32.gmra.mrb[0].mxu0 %v1015
    %v1730 = vpop.f32.mrb[0].mxu0
    %v1731 = vadd.f32 0.0, %v1730
    %v1732 = vpop.f32.mrb[0].mxu0
    %1733 = vmatprep.mubr.f32.mxu0 0.0
    %1734 = vmatmul.mubr.f32.gmra.mrb[0].mxu0 %v1018
    %v1735 = vpop.f32.mrb[0].mxu0
    %v1736 = vadd.f32 0.0, %v1735
    %v1737 = vpop.f32.mrb[0].mxu0
    %1738 = vmatprep.mubr.f32.mxu0 0.0
    %1739 = vmatmul.mubr.f32.gmra.mrb[0].mxu0 %v1021
    %v1740 = vpop.f32.mrb[0].mxu0
    %v1741 = vadd.f32 0.0, %v1740
    %v1742 = vpop.f32.mrb[0].mxu0
    %1743 = vmatprep.mubr.f32.mxu0 0.0
    %1744 = vmatmul.mubr.f32.gmra.mrb[0].mxu0 %v1024
    %v1745 = vpop.f32.mrb[0].mxu0
    %v1746 = vadd.f32 0.0, %v1745
    %v1747 = vpop.f32.mrb[0].mxu0
    %1748 = vmatprep.mubr.f32.mxu0 0.0
    %1749 = vmatmul.mubr.f32.gmra.mrb[0].mxu0 %v1027
    %v1750 = vpop.f32.mrb[0].mxu0
    %v1751 = vadd.f32 0.0, %v1750
    %v1752 = vpop.f32.mrb[0].mxu0
    %1753 = vmatprep.mubr.f32.mxu0 0.0
    %1754 = vmatmul.mubr.f32.gmra.mrb[0].mxu0 %v1030
    %v1755 = vpop.f32.mrb[0].mxu0
    %v1756 = vadd.f32 0.0, %v1755
    %v1757 = vpop.f32.mrb[0].mxu0
    %1758 = vmatprep.mubr.f32.mxu0 0.0
    %1759 = vmatmul.mubr.f32.gmra.mrb[0].mxu0 %v1033
    %v1760 = vpop.f32.mrb[0].mxu0
    %v1761 = vadd.f32 0.0, %v1760
    %v1762 = vpop.f32.mrb[0].mxu0
    %1763 = vmatprep.mubr.f32.mxu0 0.0
    %1764 = vmatmul.mubr.f32.gmra.mrb[0].mxu0 %v1036
    %v1765 = vpop.f32.mrb[0].mxu0
    %v1766 = vadd.f32 0.0, %v1765
    %v1767 = vpop.f32.mrb[0].mxu0
    %1768 = vdwg.mxu0
    %vm1769 = vcmp.eq.s32.totalorder %v1391, %v1184
    %v1770 = vsel %vm1769, 1, 0
    %v1771 = vcvt.s32.f32 %v1770
    %v1772 = vmul.f32 %v1546, %v1691
    %v1773 = vmul.f32 %v1551, %v1696
    %v1774 = vmul.f32 %v1556, %v1701
    %v1775 = vmul.f32 %v1561, %v1706
    %v1776 = vmul.f32 %v1566, %v1711
    %v1777 = vmul.f32 %v1571, %v1716
    %v1778 = vmul.f32 %v1576, %v1721
    %v1779 = vmul.f32 %v1581, %v1726
    %v1780 = vmul.f32 %v1586, %v1731
    %v1781 = vmul.f32 %v1591, %v1736
    %v1782 = vmul.f32 %v1596, %v1741
    %v1783 = vmul.f32 %v1601, %v1746
    %v1784 = vmul.f32 %v1606, %v1751
    %v1785 = vmul.f32 %v1611, %v1756
    %v1786 = vmul.f32 %v1616, %v1761
    %v1787 = vmul.f32 %v1621, %v1766
    %1788 = vmatprep.subr.mxu0 0.0
    %1789 = vmatpush1.msra.mxu0 %v1772
    %1790 = vmatprep.subr.mxu0 0.0
    %1791 = vmatpush1.msra.mxu0 %v1773
    %1792 = vmatprep.subr.mxu0 0.0
    %1793 = vmatpush1.msra.mxu0 %v1774
    %1794 = vmatprep.subr.mxu0 0.0
    %1795 = vmatpush1.msra.mxu0 %v1775
    %1796 = vmatprep.subr.mxu0 0.0
    %1797 = vmatpush1.msra.mxu0 %v1776
    %1798 = vmatprep.subr.mxu0 0.0
    %1799 = vmatpush1.msra.mxu0 %v1777
    %1800 = vmatprep.subr.mxu0 0.0
    %1801 = vmatpush1.msra.mxu0 %v1778
    %1802 = vmatprep.subr.mxu0 0.0
    %1803 = vmatpush1.msra.mxu0 %v1779
    %1804 = vmatprep.subr.mxu0 0.0
    %1805 = vmatpush1.msra.mxu0 %v1780
    %1806 = vmatprep.subr.mxu0 0.0
    %1807 = vmatpush1.msra.mxu0 %v1781
    %1808 = vmatprep.subr.mxu0 0.0
    %1809 = vmatpush1.msra.mxu0 %v1782
    %1810 = vmatprep.subr.mxu0 0.0
    %1811 = vmatpush1.msra.mxu0 %v1783
    %1812 = vmatprep.subr.mxu0 0.0
    %1813 = vmatpush1.msra.mxu0 %v1784
    %1814 = vmatprep.subr.mxu0 0.0
    %1815 = vmatpush1.msra.mxu0 %v1785
    %1816 = vmatprep.subr.mxu0 0.0
    %1817 = vmatpush1.msra.mxu0 %v1786
    %1818 = vmatprep.subr.mxu0 0.0
    %1819 = vmatpush1.msra.mxu0 %v1787
    %1820 = vmatprep.subr.mxu0 0.0
    %1821 = vmatpush1.msra.mxu0 0.0
    %1822 = vmatprep.subr.mxu0 0.0
    %1823 = vmatpush1.msra.mxu0 0.0
    %1824 = vmatprep.subr.mxu0 0.0
    %1825 = vmatpush1.msra.mxu0 0.0
    %1826 = vmatprep.subr.mxu0 0.0
    %1827 = vmatpush1.msra.mxu0 0.0
    %1828 = vmatprep.subr.mxu0 0.0
    %1829 = vmatpush1.msra.mxu0 0.0
    %1830 = vmatprep.subr.mxu0 0.0
    %1831 = vmatpush1.msra.mxu0 0.0
    %1832 = vmatprep.subr.mxu0 0.0
    %1833 = vmatpush1.msra.mxu0 0.0
    %1834 = vmatprep.subr.mxu0 0.0
    %1835 = vmatpush1.msra.mxu0 0.0
    %1836 = vmatprep.subr.mxu0 0.0
    %1837 = vmatpush1.msra.mxu0 0.0
    %1838 = vmatprep.subr.mxu0 0.0
    %1839 = vmatpush1.msra.mxu0 0.0
    %1840 = vmatprep.subr.mxu0 0.0
    %1841 = vmatpush1.msra.mxu0 0.0
    %1842 = vmatprep.subr.mxu0 0.0
    %1843 = vmatpush1.msra.mxu0 0.0
    %1844 = vmatprep.subr.mxu0 0.0
    %1845 = vmatpush1.msra.mxu0 0.0
    %1846 = vmatprep.subr.mxu0 0.0
    %1847 = vmatpush1.msra.mxu0 0.0
    %1848 = vmatprep.subr.mxu0 0.0
    %1849 = vmatpush1.msra.mxu0 0.0
    %1850 = vmatprep.subr.mxu0 0.0
    %1851 = vmatpush1.msra.mxu0 0.0
    %1852 = vmatprep.mubr.f32.mxu0 0.0
    %1853 = vmatmul.mubr.f32.gmra.mrb[0].mxu0 %v1771
    %v1854 = vpop.f32.mrb[0].mxu0
    %v1855 = vadd.f32 0.0, %v1854
    %v1856 = vpop.f32.mrb[0].mxu0
    %1857 = vdwg.mxu0
    %1858 = vst [vmem:[#allocation2] sm:$0xff] %v1855
    %v1859 = vld [vmem:[%s3 + $0x90] sm:$0xff]
    %v1860 = vld [vmem:[%s3 + $0x98] sm:$0xff]
    %v1861 = vld [vmem:[%s3 + $0xa0] sm:$0xff]
    %v1862 = vld [vmem:[%s3 + $0xa8] sm:$0xff]
    %v1863 = vld [vmem:[%s3 + $0xb0] sm:$0xff]
    %v1864 = vld [vmem:[%s3 + $0xb8] sm:$0xff]
    %v1865 = vld [vmem:[%s3 + $0xc0] sm:$0xff]
    %v1866 = vld [vmem:[%s3 + $0xc8] sm:$0xff]
    %v1867 = vld [vmem:[%s3 + $0xd0] sm:$0xff]
    %v1868 = vld [vmem:[%s3 + $0xd8] sm:$0xff]
    %v1869 = vld [vmem:[%s3 + $0xe0] sm:$0xff]
    %v1870 = vld [vmem:[%s3 + $0xe8] sm:$0xff]
    %v1871 = vld [vmem:[%s3 + $0xf0] sm:$0xff]
    %v1872 = vld [vmem:[%s3 + $0xf8] sm:$0xff]
    %v1873 = vld [vmem:[%s3 + $0x100] sm:$0xff]
    %v1874 = vld [vmem:[%s3 + $0x108] sm:$0xff]
    %1875 = vmatprep.subr.mxu0 0.0
    %1876 = vmatpush1.msra.mxu0 %v1859
    %1877 = vmatprep.subr.mxu0 0.0
    %1878 = vmatpush1.msra.mxu0 %v1860
    %1879 = vmatprep.subr.mxu0 0.0
    %1880 = vmatpush1.msra.mxu0 %v1861
    %1881 = vmatprep.subr.mxu0 0.0
    %1882 = vmatpush1.msra.mxu0 %v1862
    %1883 = vmatprep.subr.mxu0 0.0
    %1884 = vmatpush1.msra.mxu0 %v1863
    %1885 = vmatprep.subr.mxu0 0.0
    %1886 = vmatpush1.msra.mxu0 %v1864
    %1887 = vmatprep.subr.mxu0 0.0
    %1888 = vmatpush1.msra.mxu0 %v1865
    %1889 = vmatprep.subr.mxu0 0.0
    %1890 = vmatpush1.msra.mxu0 %v1866
    %1891 = vmatprep.subr.mxu0 0.0
    %1892 = vmatpush1.msra.mxu0 %v1867
    %1893 = vmatprep.subr.mxu0 0.0
    %1894 = vmatpush1.msra.mxu0 %v1868
    %1895 = vmatprep.subr.mxu0 0.0
    %1896 = vmatpush1.msra.mxu0 %v1869
    %1897 = vmatprep.subr.mxu0 0.0
    %1898 = vmatpush1.msra.mxu0 %v1870
    %1899 = vmatprep.subr.mxu0 0.0
    %1900 = vmatpush1.msra.mxu0 %v1871
    %1901 = vmatprep.subr.mxu0 0.0
    %1902 = vmatpush1.msra.mxu0 %v1872
    %1903 = vmatprep.subr.mxu0 0.0
    %1904 = vmatpush1.msra.mxu0 %v1873
    %1905 = vmatprep.subr.mxu0 0.0
    %1906 = vmatpush1.msra.mxu0 %v1874
    %1907 = vmatprep.subr.mxu0 0.0
    %1908 = vmatpush1.msra.mxu0 0.0
    %1909 = vmatprep.subr.mxu0 0.0
    %1910 = vmatpush1.msra.mxu0 0.0
    %1911 = vmatprep.subr.mxu0 0.0
    %1912 = vmatpush1.msra.mxu0 0.0
    %1913 = vmatprep.subr.mxu0 0.0
    %1914 = vmatpush1.msra.mxu0 0.0
    %1915 = vmatprep.subr.mxu0 0.0
    %1916 = vmatpush1.msra.mxu0 0.0
    %1917 = vmatprep.subr.mxu0 0.0
    %1918 = vmatpush1.msra.mxu0 0.0
    %1919 = vmatprep.subr.mxu0 0.0
    %1920 = vmatpush1.msra.mxu0 0.0
    %1921 = vmatprep.subr.mxu0 0.0
    %1922 = vmatpush1.msra.mxu0 0.0
    %1923 = vmatprep.subr.mxu0 0.0
    %1924 = vmatpush1.msra.mxu0 0.0
    %1925 = vmatprep.subr.mxu0 0.0
    %1926 = vmatpush1.msra.mxu0 0.0
    %1927 = vmatprep.subr.mxu0 0.0
    %1928 = vmatpush1.msra.mxu0 0.0
    %1929 = vmatprep.subr.mxu0 0.0
    %1930 = vmatpush1.msra.mxu0 0.0
    %1931 = vmatprep.subr.mxu0 0.0
    %1932 = vmatpush1.msra.mxu0 0.0
    %1933 = vmatprep.subr.mxu0 0.0
    %1934 = vmatpush1.msra.mxu0 0.0
    %1935 = vmatprep.subr.mxu0 0.0
    %1936 = vmatpush1.msra.mxu0 0.0
    %1937 = vmatprep.subr.mxu0 0.0
    %1938 = vmatpush1.msra.mxu0 0.0
    %1939 = vmatprep.mubr.f32.mxu0 0.0
    %1940 = vmatmul.mubr.f32.gmra.mrb[0].mxu0 %v1855
    %v1941 = vpop.f32.mrb[0].mxu0
    %v1942 = vadd.f32 0.0, %v1941
    %v1943 = vpop.f32.mrb[0].mxu0
    %1944 = vdwg.mxu0
    %v1945 = vld [vmem:[%s3 + $0x110] sm:$0x1]
    %v1946 = vlaneseq
    %v1947 = vshrl.u32 %v1946, 7
    %v1948 = vsub.s32 0, %v1947
    %v1949 = vrot.slane %v1945, %v1948
    %v1950 = vadd.f32 %v1942, %v1949
    %vm1951 = vcmask 31744
    %v1952 = vsel %vm1951, %v1950, -inf
    %1953 = vmax.xlane.f32.xlu0 %v1952
    %v1954 = vpop.xlane.xlu0 %1953
    %v1955 = vsub.f32 %v1950, %v1954
    %v1956 = vmul.f32 %v1955, 1.442695
    %v1957 = vpow.pop %v1956
    %v1958 = vsel %vm1951, %v1957, 0.0
    %1959 = vadd.xlane.f32.xlu0 %v1958
    %v1960 = vpop.xlane.xlu0 %1959
    %v1961 = vlog2.pop %v1960
    %v1962 = vmul.f32 %v1961, 0.6931472
    %v1963 = vsub.f32 %v1955, %v1962
    %1965 = vrot.lane.b32.xlu0 %v1942, 124
    %v1966 = vpop.permute.xlu0 %1965
    %1969 = vrot.lane.b32.xlu0 %v1949, 124
    %v1970 = vpop.permute.xlu0 %1969
    %vm1972 = vcmask 64512
    %v1974 = vsel %vm1972, %v52, 0
    %1976 = vmatprep.subr.mxu0 0.0
    %1977 = vmatpush1.msra.mxu0 %v1966
    %1978 = vmatprep.subr.mxu0 0.0
    %1979 = vmatpush1.msra.mxu0 0.0
    %1980 = vmatprep.subr.mxu0 0.0
    %1981 = vmatpush1.msra.mxu0 0.0
    %1982 = vmatprep.subr.mxu0 0.0
    %1983 = vmatpush1.msra.mxu0 0.0
    %1984 = vmatprep.subr.mxu0 0.0
    %1985 = vmatpush1.msra.mxu0 0.0
    %1986 = vmatprep.subr.mxu0 0.0
    %1987 = vmatpush1.msra.mxu0 0.0
    %1988 = vmatprep.subr.mxu0 0.0
    %1989 = vmatpush1.msra.mxu0 0.0
    %1990 = vmatprep.subr.mxu0 0.0
    %1991 = vmatpush1.msra.mxu0 0.0
    %1992 = vmatprep.subr.mxu0 0.0
    %1993 = vmatpush1.msra.mxu0 0.0
    %1994 = vmatprep.subr.mxu0 0.0
    %1995 = vmatpush1.msra.mxu0 0.0
    %1996 = vmatprep.subr.mxu0 0.0
    %1997 = vmatpush1.msra.mxu0 0.0
    %1998 = vmatprep.subr.mxu0 0.0
    %1999 = vmatpush1.msra.mxu0 0.0
    %2000 = vmatprep.subr.mxu0 0.0
    %2001 = vmatpush1.msra.mxu0 0.0
    %2002 = vmatprep.subr.mxu0 0.0
    %2003 = vmatpush1.msra.mxu0 0.0
    %2004 = vmatprep.subr.mxu0 0.0
    %2005 = vmatpush1.msra.mxu0 0.0
    %2006 = vmatprep.subr.mxu0 0.0
    %2007 = vmatpush1.msra.mxu0 0.0
    %2008 = vmatprep.subr.mxu0 0.0
    %2009 = vmatpush1.msra.mxu0 0.0
    %2010 = vmatprep.subr.mxu0 0.0
    %2011 = vmatpush1.msra.mxu0 0.0
    %2012 = vmatprep.subr.mxu0 0.0
    %2013 = vmatpush1.msra.mxu0 0.0
    %2014 = vmatprep.subr.mxu0 0.0
    %2015 = vmatpush1.msra.mxu0 0.0
    %2016 = vmatprep.subr.mxu0 0.0
    %2017 = vmatpush1.msra.mxu0 0.0
    %2018 = vmatprep.subr.mxu0 0.0
    %2019 = vmatpush1.msra.mxu0 0.0
    %2020 = vmatprep.subr.mxu0 0.0
    %2021 = vmatpush1.msra.mxu0 0.0
    %2022 = vmatprep.subr.mxu0 0.0
    %2023 = vmatpush1.msra.mxu0 0.0
    %2024 = vmatprep.subr.mxu0 0.0
    %2025 = vmatpush1.msra.mxu0 0.0
    %2026 = vmatprep.subr.mxu0 0.0
    %2027 = vmatpush1.msra.mxu0 0.0
    %2028 = vmatprep.subr.mxu0 0.0
    %2029 = vmatpush1.msra.mxu0 0.0
    %2030 = vmatprep.subr.mxu0 0.0
    %2031 = vmatpush1.msra.mxu0 0.0
    %2032 = vmatprep.subr.mxu0 0.0
    %2033 = vmatpush1.msra.mxu0 0.0
    %2034 = vmatprep.subr.mxu0 0.0
    %2035 = vmatpush1.msra.mxu0 0.0
    %2036 = vmatprep.subr.mxu0 0.0
    %2037 = vmatpush1.msra.mxu0 0.0
    %2038 = vmatprep.subr.mxu0 0.0
    %2039 = vmatpush1.msra.mxu0 0.0
    %2040 = vmatprep.mubr.f32.mxu0 0.0
    %2041 = vmatmul.mubr.f32.gmra.mrb[0].mxu0 %v1974
    %v2042 = vpop.f32.mrb[0].mxu0
    %v2043 = vadd.f32 %v1970, %v2042
    %v2044 = vpop.f32.mrb[0].mxu0
    %2045 = vdwg.mxu0
    %v2046 = vmax.f32 %v2043, 0.0
    %v2047 = vld [vmem:[%s3 + $0x118] sm:$0xff]
    %v2049 = vsel %vm1972, %v2046, 0
    %2051 = vmatprep.subr.mxu0 0.0
    %2052 = vmatpush1.msra.mxu0 %v2047
    %2053 = vmatprep.subr.mxu0 0.0
    %2054 = vmatpush1.msra.mxu0 0.0
    %2055 = vmatprep.subr.mxu0 0.0
    %2056 = vmatpush1.msra.mxu0 0.0
    %2057 = vmatprep.subr.mxu0 0.0
    %2058 = vmatpush1.msra.mxu0 0.0
    %2059 = vmatprep.subr.mxu0 0.0
    %2060 = vmatpush1.msra.mxu0 0.0
    %2061 = vmatprep.subr.mxu0 0.0
    %2062 = vmatpush1.msra.mxu0 0.0
    %2063 = vmatprep.subr.mxu0 0.0
    %2064 = vmatpush1.msra.mxu0 0.0
    %2065 = vmatprep.subr.mxu0 0.0
    %2066 = vmatpush1.msra.mxu0 0.0
    %2067 = vmatprep.subr.mxu0 0.0
    %2068 = vmatpush1.msra.mxu0 0.0
    %2069 = vmatprep.subr.mxu0 0.0
    %2070 = vmatpush1.msra.mxu0 0.0
    %2071 = vmatprep.subr.mxu0 0.0
    %2072 = vmatpush1.msra.mxu0 0.0
    %2073 = vmatprep.subr.mxu0 0.0
    %2074 = vmatpush1.msra.mxu0 0.0
    %2075 = vmatprep.subr.mxu0 0.0
    %2076 = vmatpush1.msra.mxu0 0.0
    %2077 = vmatprep.subr.mxu0 0.0
    %2078 = vmatpush1.msra.mxu0 0.0
    %2079 = vmatprep.subr.mxu0 0.0
    %2080 = vmatpush1.msra.mxu0 0.0
    %2081 = vmatprep.subr.mxu0 0.0
    %2082 = vmatpush1.msra.mxu0 0.0
    %2083 = vmatprep.subr.mxu0 0.0
    %2084 = vmatpush1.msra.mxu0 0.0
    %2085 = vmatprep.subr.mxu0 0.0
    %2086 = vmatpush1.msra.mxu0 0.0
    %2087 = vmatprep.subr.mxu0 0.0
    %2088 = vmatpush1.msra.mxu0 0.0
    %2089 = vmatprep.subr.mxu0 0.0
    %2090 = vmatpush1.msra.mxu0 0.0
    %2091 = vmatprep.subr.mxu0 0.0
    %2092 = vmatpush1.msra.mxu0 0.0
    %2093 = vmatprep.subr.mxu0 0.0
    %2094 = vmatpush1.msra.mxu0 0.0
    %2095 = vmatprep.subr.mxu0 0.0
    %2096 = vmatpush1.msra.mxu0 0.0
    %2097 = vmatprep.subr.mxu0 0.0
    %2098 = vmatpush1.msra.mxu0 0.0
    %2099 = vmatprep.subr.mxu0 0.0
    %2100 = vmatpush1.msra.mxu0 0.0
    %2101 = vmatprep.subr.mxu0 0.0
    %2102 = vmatpush1.msra.mxu0 0.0
    %2103 = vmatprep.subr.mxu0 0.0
    %2104 = vmatpush1.msra.mxu0 0.0
    %2105 = vmatprep.subr.mxu0 0.0
    %2106 = vmatpush1.msra.mxu0 0.0
    %2107 = vmatprep.subr.mxu0 0.0
    %2108 = vmatpush1.msra.mxu0 0.0
    %2109 = vmatprep.subr.mxu0 0.0
    %2110 = vmatpush1.msra.mxu0 0.0
    %2111 = vmatprep.subr.mxu0 0.0
    %2112 = vmatpush1.msra.mxu0 0.0
    %2113 = vmatprep.subr.mxu0 0.0
    %2114 = vmatpush1.msra.mxu0 0.0
    %2115 = vmatprep.mubr.f32.mxu0 0.0
    %2116 = vmatmul.mubr.f32.gmra.mrb[0].mxu0 %v2049
    %v2117 = vpop.f32.mrb[0].mxu0
    %v2118 = vadd.f32 0.0, %v2117
    %v2119 = vpop.f32.mrb[0].mxu0
    %2120 = vdwg.mxu0
    %v2121 = vld [vmem:[%s3 + $0x120] sm:$0x1]
    %v2122 = vlaneseq
    %v2123 = vshrl.u32 %v2122, 7
    %v2124 = vsub.s32 0, %v2123
    %v2125 = vrot.slane %v2121, %v2124
    %2126 = vmatprep.subr.mxu0 0.0
    %2127 = vmatpush1.msra.mxu0 %v2118
    %2128 = vmatprep.subr.mxu0 0.0
    %2129 = vmatpush1.msra.mxu0 0.0
    %2130 = vmatprep.subr.mxu0 0.0
    %2131 = vmatpush1.msra.mxu0 0.0
    %2132 = vmatprep.subr.mxu0 0.0
    %2133 = vmatpush1.msra.mxu0 0.0
    %2134 = vmatprep.subr.mxu0 0.0
    %2135 = vmatpush1.msra.mxu0 0.0
    %2136 = vmatprep.subr.mxu0 0.0
    %2137 = vmatpush1.msra.mxu0 0.0
    %2138 = vmatprep.subr.mxu0 0.0
    %2139 = vmatpush1.msra.mxu0 0.0
    %2140 = vmatprep.subr.mxu0 0.0
    %2141 = vmatpush1.msra.mxu0 0.0
    %2142 = vmatprep.subr.mxu0 0.0
    %2143 = vmatpush1.msra.mxu0 0.0
    %2144 = vmatprep.subr.mxu0 0.0
    %2145 = vmatpush1.msra.mxu0 0.0
    %2146 = vmatprep.subr.mxu0 0.0
    %2147 = vmatpush1.msra.mxu0 0.0
    %2148 = vmatprep.subr.mxu0 0.0
    %2149 = vmatpush1.msra.mxu0 0.0
    %2150 = vmatprep.subr.mxu0 0.0
    %2151 = vmatpush1.msra.mxu0 0.0
    %2152 = vmatprep.subr.mxu0 0.0
    %2153 = vmatpush1.msra.mxu0 0.0
    %2154 = vmatprep.subr.mxu0 0.0
    %2155 = vmatpush1.msra.mxu0 0.0
    %2156 = vmatprep.subr.mxu0 0.0
    %2157 = vmatpush1.msra.mxu0 0.0
    %2158 = vmatprep.subr.mxu0 0.0
    %2159 = vmatpush1.msra.mxu0 0.0
    %2160 = vmatprep.subr.mxu0 0.0
    %2161 = vmatpush1.msra.mxu0 0.0
    %2162 = vmatprep.subr.mxu0 0.0
    %2163 = vmatpush1.msra.mxu0 0.0
    %2164 = vmatprep.subr.mxu0 0.0
    %2165 = vmatpush1.msra.mxu0 0.0
    %2166 = vmatprep.subr.mxu0 0.0
    %2167 = vmatpush1.msra.mxu0 0.0
    %2168 = vmatprep.subr.mxu0 0.0
    %2169 = vmatpush1.msra.mxu0 0.0
    %2170 = vmatprep.subr.mxu0 0.0
    %2171 = vmatpush1.msra.mxu0 0.0
    %2172 = vmatprep.subr.mxu0 0.0
    %2173 = vmatpush1.msra.mxu0 0.0
    %2174 = vmatprep.subr.mxu0 0.0
    %2175 = vmatpush1.msra.mxu0 0.0
    %2176 = vmatprep.subr.mxu0 0.0
    %2177 = vmatpush1.msra.mxu0 0.0
    %2178 = vmatprep.subr.mxu0 0.0
    %2179 = vmatpush1.msra.mxu0 0.0
    %2180 = vmatprep.subr.mxu0 0.0
    %2181 = vmatpush1.msra.mxu0 0.0
    %2182 = vmatprep.subr.mxu0 0.0
    %2183 = vmatpush1.msra.mxu0 0.0
    %2184 = vmatprep.subr.mxu0 0.0
    %2185 = vmatpush1.msra.mxu0 0.0
    %2186 = vmatprep.subr.mxu0 0.0
    %2187 = vmatpush1.msra.mxu0 0.0
    %2188 = vmatprep.subr.mxu0 0.0
    %2189 = vmatpush1.msra.mxu0 0.0
    %2190 = vmatprep.mubr.f32.mxu0 0.0
    %2191 = vmatmul.mubr.f32.gmra.mrb[0].mxu0 %v1974
    %v2192 = vpop.f32.mrb[0].mxu0
    %v2193 = vadd.f32 %v2125, %v2192
    %v2194 = vpop.f32.mrb[0].mxu0
    %2195 = vdwg.mxu0
    %v2196 = vmax.f32 %v2193, 0.0
    %v2197 = vld [vmem:[%s3 + $0x128] sm:$0xff]
    %v2199 = vsel %vm1972, %v2196, 0
    %2201 = vmatprep.subr.mxu0 0.0
    %2202 = vmatpush1.msra.mxu0 %v2197
    %2203 = vmatprep.subr.mxu0 0.0
    %2204 = vmatpush1.msra.mxu0 0.0
    %2205 = vmatprep.subr.mxu0 0.0
    %2206 = vmatpush1.msra.mxu0 0.0
    %2207 = vmatprep.subr.mxu0 0.0
    %2208 = vmatpush1.msra.mxu0 0.0
    %2209 = vmatprep.subr.mxu0 0.0
    %2210 = vmatpush1.msra.mxu0 0.0
    %2211 = vmatprep.subr.mxu0 0.0
    %2212 = vmatpush1.msra.mxu0 0.0
    %2213 = vmatprep.subr.mxu0 0.0
    %2214 = vmatpush1.msra.mxu0 0.0
    %2215 = vmatprep.subr.mxu0 0.0
    %2216 = vmatpush1.msra.mxu0 0.0
    %2217 = vmatprep.subr.mxu0 0.0
    %2218 = vmatpush1.msra.mxu0 0.0
    %2219 = vmatprep.subr.mxu0 0.0
    %2220 = vmatpush1.msra.mxu0 0.0
    %2221 = vmatprep.subr.mxu0 0.0
    %2222 = vmatpush1.msra.mxu0 0.0
    %2223 = vmatprep.subr.mxu0 0.0
    %2224 = vmatpush1.msra.mxu0 0.0
    %2225 = vmatprep.subr.mxu0 0.0
    %2226 = vmatpush1.msra.mxu0 0.0
    %2227 = vmatprep.subr.mxu0 0.0
    %2228 = vmatpush1.msra.mxu0 0.0
    %2229 = vmatprep.subr.mxu0 0.0
    %2230 = vmatpush1.msra.mxu0 0.0
    %2231 = vmatprep.subr.mxu0 0.0
    %2232 = vmatpush1.msra.mxu0 0.0
    %2233 = vmatprep.subr.mxu0 0.0
    %2234 = vmatpush1.msra.mxu0 0.0
    %2235 = vmatprep.subr.mxu0 0.0
    %2236 = vmatpush1.msra.mxu0 0.0
    %2237 = vmatprep.subr.mxu0 0.0
    %2238 = vmatpush1.msra.mxu0 0.0
    %2239 = vmatprep.subr.mxu0 0.0
    %2240 = vmatpush1.msra.mxu0 0.0
    %2241 = vmatprep.subr.mxu0 0.0
    %2242 = vmatpush1.msra.mxu0 0.0
    %2243 = vmatprep.subr.mxu0 0.0
    %2244 = vmatpush1.msra.mxu0 0.0
    %2245 = vmatprep.subr.mxu0 0.0
    %2246 = vmatpush1.msra.mxu0 0.0
    %2247 = vmatprep.subr.mxu0 0.0
    %2248 = vmatpush1.msra.mxu0 0.0
    %2249 = vmatprep.subr.mxu0 0.0
    %2250 = vmatpush1.msra.mxu0 0.0
    %2251 = vmatprep.subr.mxu0 0.0
    %2252 = vmatpush1.msra.mxu0 0.0
    %2253 = vmatprep.subr.mxu0 0.0
    %2254 = vmatpush1.msra.mxu0 0.0
    %2255 = vmatprep.subr.mxu0 0.0
    %2256 = vmatpush1.msra.mxu0 0.0
    %2257 = vmatprep.subr.mxu0 0.0
    %2258 = vmatpush1.msra.mxu0 0.0
    %2259 = vmatprep.subr.mxu0 0.0
    %2260 = vmatpush1.msra.mxu0 0.0
    %2261 = vmatprep.subr.mxu0 0.0
    %2262 = vmatpush1.msra.mxu0 0.0
    %2263 = vmatprep.subr.mxu0 0.0
    %2264 = vmatpush1.msra.mxu0 0.0
    %2265 = vmatprep.mubr.f32.mxu0 0.0
    %2266 = vmatmul.mubr.f32.gmra.mrb[0].mxu0 %v2199
    %v2267 = vpop.f32.mrb[0].mxu0
    %v2268 = vadd.f32 0.0, %v2267
    %v2269 = vpop.f32.mrb[0].mxu0
    %2270 = vdwg.mxu0
    %v2271 = vld [vmem:[%s3 + $0x130] sm:$0x1]
    %v2272 = vlaneseq
    %v2273 = vshrl.u32 %v2272, 7
    %v2274 = vsub.s32 0, %v2273
    %v2275 = vrot.slane %v2271, %v2274
    %2276 = vmatprep.subr.mxu0 0.0
    %2277 = vmatpush1.msra.mxu0 %v2268
    %2278 = vmatprep.subr.mxu0 0.0
    %2279 = vmatpush1.msra.mxu0 0.0
    %2280 = vmatprep.subr.mxu0 0.0
    %2281 = vmatpush1.msra.mxu0 0.0
    %2282 = vmatprep.subr.mxu0 0.0
    %2283 = vmatpush1.msra.mxu0 0.0
    %2284 = vmatprep.subr.mxu0 0.0
    %2285 = vmatpush1.msra.mxu0 0.0
    %2286 = vmatprep.subr.mxu0 0.0
    %2287 = vmatpush1.msra.mxu0 0.0
    %2288 = vmatprep.subr.mxu0 0.0
    %2289 = vmatpush1.msra.mxu0 0.0
    %2290 = vmatprep.subr.mxu0 0.0
    %2291 = vmatpush1.msra.mxu0 0.0
    %2292 = vmatprep.subr.mxu0 0.0
    %2293 = vmatpush1.msra.mxu0 0.0
    %2294 = vmatprep.subr.mxu0 0.0
    %2295 = vmatpush1.msra.mxu0 0.0
    %2296 = vmatprep.subr.mxu0 0.0
    %2297 = vmatpush1.msra.mxu0 0.0
    %2298 = vmatprep.subr.mxu0 0.0
    %2299 = vmatpush1.msra.mxu0 0.0
    %2300 = vmatprep.subr.mxu0 0.0
    %2301 = vmatpush1.msra.mxu0 0.0
    %2302 = vmatprep.subr.mxu0 0.0
    %2303 = vmatpush1.msra.mxu0 0.0
    %2304 = vmatprep.subr.mxu0 0.0
    %2305 = vmatpush1.msra.mxu0 0.0
    %2306 = vmatprep.subr.mxu0 0.0
    %2307 = vmatpush1.msra.mxu0 0.0
    %2308 = vmatprep.subr.mxu0 0.0
    %2309 = vmatpush1.msra.mxu0 0.0
    %2310 = vmatprep.subr.mxu0 0.0
    %2311 = vmatpush1.msra.mxu0 0.0
    %2312 = vmatprep.subr.mxu0 0.0
    %2313 = vmatpush1.msra.mxu0 0.0
    %2314 = vmatprep.subr.mxu0 0.0
    %2315 = vmatpush1.msra.mxu0 0.0
    %2316 = vmatprep.subr.mxu0 0.0
    %2317 = vmatpush1.msra.mxu0 0.0
    %2318 = vmatprep.subr.mxu0 0.0
    %2319 = vmatpush1.msra.mxu0 0.0
    %2320 = vmatprep.subr.mxu0 0.0
    %2321 = vmatpush1.msra.mxu0 0.0
    %2322 = vmatprep.subr.mxu0 0.0
    %2323 = vmatpush1.msra.mxu0 0.0
    %2324 = vmatprep.subr.mxu0 0.0
    %2325 = vmatpush1.msra.mxu0 0.0
    %2326 = vmatprep.subr.mxu0 0.0
    %2327 = vmatpush1.msra.mxu0 0.0
    %2328 = vmatprep.subr.mxu0 0.0
    %2329 = vmatpush1.msra.mxu0 0.0
    %2330 = vmatprep.subr.mxu0 0.0
    %2331 = vmatpush1.msra.mxu0 0.0
    %2332 = vmatprep.subr.mxu0 0.0
    %2333 = vmatpush1.msra.mxu0 0.0
    %2334 = vmatprep.subr.mxu0 0.0
    %2335 = vmatpush1.msra.mxu0 0.0
    %2336 = vmatprep.subr.mxu0 0.0
    %2337 = vmatpush1.msra.mxu0 0.0
    %2338 = vmatprep.subr.mxu0 0.0
    %2339 = vmatpush1.msra.mxu0 0.0
    %2340 = vmatprep.mubr.f32.mxu0 0.0
    %2341 = vmatmul.mubr.f32.gmra.mrb[0].mxu0 %v1974
    %v2342 = vpop.f32.mrb[0].mxu0
    %v2343 = vadd.f32 %v2275, %v2342
    %v2344 = vpop.f32.mrb[0].mxu0
    %2345 = vdwg.mxu0
    %v2346 = vsel %vm1951, %v2343, -inf
    %2347 = vmax.xlane.f32.xlu0 %v2346
    %v2348 = vpop.xlane.xlu0 %2347
    %v2349 = vsub.f32 %v2343, %v2348
    %v2350 = vmul.f32 %v2349, 1.442695
    %v2351 = vpow.pop %v2350
    %v2352 = vsel %vm1951, %v2351, 0.0
    %2353 = vadd.xlane.f32.xlu0 %v2352
    %v2354 = vpop.xlane.xlu0 %2353
    %v2355 = vlog2.pop %v2354
    %v2356 = vmul.f32 %v2355, 0.6931472
    %v2357 = vsub.f32 %v2349, %v2356
    %2358 = vxpose.xlu0.b32.start [1/16] %v1375, 128
    %2359 = vxpose.xlu0.b32.cont [2/16] %v1376, 128
    %2360 = vxpose.xlu0.b32.cont [3/16] %v1377, 128
    %2361 = vxpose.xlu0.b32.cont [4/16] %v1378, 128
    %2362 = vxpose.xlu0.b32.cont [5/16] %v1379, 128
    %2363 = vxpose.xlu0.b32.cont [6/16] %v1380, 128
    %2364 = vxpose.xlu0.b32.cont [7/16] %v1381, 128
    %2365 = vxpose.xlu0.b32.cont [8/16] %v1382, 128
    %2366 = vxpose.xlu0.b32.cont [9/16] %v1383, 128
    %2367 = vxpose.xlu0.b32.cont [10/16] %v1384, 128
    %2368 = vxpose.xlu0.b32.cont [11/16] %v1385, 128
    %2369 = vxpose.xlu0.b32.cont [12/16] %v1386, 128
    %2370 = vxpose.xlu0.b32.cont [13/16] %v1387, 128
    %2371 = vxpose.xlu0.b32.cont [14/16] %v1388, 128
    %2372 = vxpose.xlu0.b32.cont [15/16] %v1389, 128
    %2373 = vxpose.xlu0.b32.end [16/16] %v1390, 128
    %v2374 = vpop.trf.xlu0
    %v2375 = vpop.trf.xlu0
    %v2376 = vpop.trf.xlu0
    %v2377 = vpop.trf.xlu0
    %v2378 = vpop.trf.xlu0
    %v2379 = vpop.trf.xlu0
    %v2380 = vpop.trf.xlu0
    %v2381 = vpop.trf.xlu0
    %v2382 = vpop.trf.xlu0
    %v2383 = vpop.trf.xlu0
    %v2384 = vpop.trf.xlu0
    %v2385 = vpop.trf.xlu0
    %v2386 = vpop.trf.xlu0
    %v2387 = vpop.trf.xlu0
    %v2388 = vpop.trf.xlu0
    %v2389 = vpop.trf.xlu0
    %2390 = vmatprep.subr.mxu0 0.0
    %2391 = vmatpush1.msra.mxu0 %v1375
    %2392 = vmatprep.subr.mxu0 0.0
    %2393 = vmatpush1.msra.mxu0 %v1376
    %2394 = vmatprep.subr.mxu0 0.0
    %2395 = vmatpush1.msra.mxu0 %v1377
    %2396 = vmatprep.subr.mxu0 0.0
    %2397 = vmatpush1.msra.mxu0 %v1378
    %2398 = vmatprep.subr.mxu0 0.0
    %2399 = vmatpush1.msra.mxu0 %v1379
    %2400 = vmatprep.subr.mxu0 0.0
    %2401 = vmatpush1.msra.mxu0 %v1380
    %2402 = vmatprep.subr.mxu0 0.0
    %2403 = vmatpush1.msra.mxu0 %v1381
    %2404 = vmatprep.subr.mxu0 0.0
    %2405 = vmatpush1.msra.mxu0 %v1382
    %2406 = vmatprep.subr.mxu0 0.0
    %2407 = vmatpush1.msra.mxu0 %v1383
    %2408 = vmatprep.subr.mxu0 0.0
    %2409 = vmatpush1.msra.mxu0 %v1384
    %2410 = vmatprep.subr.mxu0 0.0
    %2411 = vmatpush1.msra.mxu0 %v1385
    %2412 = vmatprep.subr.mxu0 0.0
    %2413 = vmatpush1.msra.mxu0 %v1386
    %2414 = vmatprep.subr.mxu0 0.0
    %2415 = vmatpush1.msra.mxu0 %v1387
    %2416 = vmatprep.subr.mxu0 0.0
    %2417 = vmatpush1.msra.mxu0 %v1388
    %2418 = vmatprep.subr.mxu0 0.0
    %2419 = vmatpush1.msra.mxu0 %v1389
    %2420 = vmatprep.subr.mxu0 0.0
    %2421 = vmatpush1.msra.mxu0 %v1390
    %2422 = vmatprep.subr.mxu0 0.0
    %2423 = vmatpush1.msra.mxu0 0.0
    %2424 = vmatprep.subr.mxu0 0.0
    %2425 = vmatpush1.msra.mxu0 0.0
    %2426 = vmatprep.subr.mxu0 0.0
    %2427 = vmatpush1.msra.mxu0 0.0
    %2428 = vmatprep.subr.mxu0 0.0
    %2429 = vmatpush1.msra.mxu0 0.0
    %2430 = vmatprep.subr.mxu0 0.0
    %2431 = vmatpush1.msra.mxu0 0.0
    %2432 = vmatprep.subr.mxu0 0.0
    %2433 = vmatpush1.msra.mxu0 0.0
    %2434 = vmatprep.subr.mxu0 0.0
    %2435 = vmatpush1.msra.mxu0 0.0
    %2436 = vmatprep.subr.mxu0 0.0
    %2437 = vmatpush1.msra.mxu0 0.0
    %2438 = vmatprep.subr.mxu0 0.0
    %2439 = vmatpush1.msra.mxu0 0.0
    %2440 = vmatprep.subr.mxu0 0.0
    %2441 = vmatpush1.msra.mxu0 0.0
    %2442 = vmatprep.subr.mxu0 0.0
    %2443 = vmatpush1.msra.mxu0 0.0
    %2444 = vmatprep.subr.mxu0 0.0
    %2445 = vmatpush1.msra.mxu0 0.0
    %2446 = vmatprep.subr.mxu0 0.0
    %2447 = vmatpush1.msra.mxu0 0.0
    %2448 = vmatprep.subr.mxu0 0.0
    %2449 = vmatpush1.msra.mxu0 0.0
    %2450 = vmatprep.subr.mxu0 0.0
    %2451 = vmatpush1.msra.mxu0 0.0
    %2452 = vmatprep.subr.mxu0 0.0
    %2453 = vmatpush1.msra.mxu0 0.0
    %2454 = vmatprep.mubr.f32.mxu0 0.0
    %2455 = vmatmul.mubr.f32.gmra.mrb[0].mxu0 %v2374
    %v2456 = vpop.f32.mrb[0].mxu0
    %v2457 = vadd.f32 0.0, %v2456
    %v2458 = vpop.f32.mrb[0].mxu0
    %2459 = vmatprep.mubr.f32.mxu0 0.0
    %2460 = vmatmul.mubr.f32.gmra.mrb[0].mxu0 %v2375
    %v2461 = vpop.f32.mrb[0].mxu0
    %v2462 = vadd.f32 0.0, %v2461
    %v2463 = vpop.f32.mrb[0].mxu0
    %2464 = vmatprep.mubr.f32.mxu0 0.0
    %2465 = vmatmul.mubr.f32.gmra.mrb[0].mxu0 %v2376
    %v2466 = vpop.f32.mrb[0].mxu0
    %v2467 = vadd.f32 0.0, %v2466
    %v2468 = vpop.f32.mrb[0].mxu0
    %2469 = vmatprep.mubr.f32.mxu0 0.0
    %2470 = vmatmul.mubr.f32.gmra.mrb[0].mxu0 %v2377
    %v2471 = vpop.f32.mrb[0].mxu0
    %v2472 = vadd.f32 0.0, %v2471
    %v2473 = vpop.f32.mrb[0].mxu0
    %2474 = vmatprep.mubr.f32.mxu0 0.0
    %2475 = vmatmul.mubr.f32.gmra.mrb[0].mxu0 %v2378
    %v2476 = vpop.f32.mrb[0].mxu0
    %v2477 = vadd.f32 0.0, %v2476
    %v2478 = vpop.f32.mrb[0].mxu0
    %2479 = vmatprep.mubr.f32.mxu0 0.0
    %2480 = vmatmul.mubr.f32.gmra.mrb[0].mxu0 %v2379
    %v2481 = vpop.f32.mrb[0].mxu0
    %v2482 = vadd.f32 0.0, %v2481
    %v2483 = vpop.f32.mrb[0].mxu0
    %2484 = vmatprep.mubr.f32.mxu0 0.0
    %2485 = vmatmul.mubr.f32.gmra.mrb[0].mxu0 %v2380
    %v2486 = vpop.f32.mrb[0].mxu0
    %v2487 = vadd.f32 0.0, %v2486
    %v2488 = vpop.f32.mrb[0].mxu0
    %2489 = vmatprep.mubr.f32.mxu0 0.0
    %2490 = vmatmul.mubr.f32.gmra.mrb[0].mxu0 %v2381
    %v2491 = vpop.f32.mrb[0].mxu0
    %v2492 = vadd.f32 0.0, %v2491
    %v2493 = vpop.f32.mrb[0].mxu0
    %2494 = vdwg.mxu0
    %vm2495 = vcmp.eq.s32.totalorder %v1184, %v1201
    %vm2496 = vcmp.eq.s32.totalorder %v1185, %v1201
    %vm2497 = vcmp.eq.s32.totalorder %v1186, %v1201
    %vm2498 = vcmp.eq.s32.totalorder %v1187, %v1201
    %vm2499 = vcmp.eq.s32.totalorder %v1188, %v1201
    %vm2500 = vcmp.eq.s32.totalorder %v1189, %v1201
    %vm2501 = vcmp.eq.s32.totalorder %v1190, %v1201
    %vm2502 = vcmp.eq.s32.totalorder %v1191, %v1201
    %v2503 = vsel %vm2495, 1, 0
    %v2504 = vsel %vm2496, 1, 0
    %v2505 = vsel %vm2497, 1, 0
    %v2506 = vsel %vm2498, 1, 0
    %v2507 = vsel %vm2499, 1, 0
    %v2508 = vsel %vm2500, 1, 0
    %v2509 = vsel %vm2501, 1, 0
    %v2510 = vsel %vm2502, 1, 0
    %v2511 = vcvt.s32.f32 %v2503
    %v2512 = vcvt.s32.f32 %v2504
    %v2513 = vcvt.s32.f32 %v2505
    %v2514 = vcvt.s32.f32 %v2506
    %v2515 = vcvt.s32.f32 %v2507
    %v2516 = vcvt.s32.f32 %v2508
    %v2517 = vcvt.s32.f32 %v2509
    %v2518 = vcvt.s32.f32 %v2510
    %v2519 = vmul.f32 %v2511, 2.0
    %v2520 = vmul.f32 %v2512, 2.0
    %v2521 = vmul.f32 %v2513, 2.0
    %v2522 = vmul.f32 %v2514, 2.0
    %v2523 = vmul.f32 %v2515, 2.0
    %v2524 = vmul.f32 %v2516, 2.0
    %v2525 = vmul.f32 %v2517, 2.0
    %v2526 = vmul.f32 %v2518, 2.0
    %v2527 = vsub.f32 %v2457, %v2519
    %v2528 = vsub.f32 %v2462, %v2520
    %v2529 = vsub.f32 %v2467, %v2521
    %v2530 = vsub.f32 %v2472, %v2522
    %v2531 = vsub.f32 %v2477, %v2523
    %v2532 = vsub.f32 %v2482, %v2524
    %v2533 = vsub.f32 %v2487, %v2525
    %v2534 = vsub.f32 %v2492, %v2526
    %v2535 = vmul.f32 %v2457, %v2527
    %v2536 = vmul.f32 %v2462, %v2528
    %v2537 = vmul.f32 %v2467, %v2529
    %v2538 = vmul.f32 %v2472, %v2530
    %v2539 = vmul.f32 %v2477, %v2531
    %v2540 = vmul.f32 %v2482, %v2532
    %v2541 = vmul.f32 %v2487, %v2533
    %v2542 = vmul.f32 %v2492, %v2534
    %v2543 = vsel %vm1251, %v2535, 0.0
    %2544 = vadd.xlane.f32.xlu0 %v2543
    %v2545 = vpop.xlane.xlu0 %2544
    %v2546 = vsel %vm1251, %v2536, 0.0
    %2547 = vadd.xlane.f32.xlu0 %v2546
    %v2548 = vpop.xlane.xlu0 %2547
    %v2549 = vsel %vm1251, %v2537, 0.0
    %2550 = vadd.xlane.f32.xlu0 %v2549
    %v2551 = vpop.xlane.xlu0 %2550
    %v2552 = vsel %vm1251, %v2538, 0.0
    %2553 = vadd.xlane.f32.xlu0 %v2552
    %v2554 = vpop.xlane.xlu0 %2553
    %v2555 = vsel %vm1251, %v2539, 0.0
    %2556 = vadd.xlane.f32.xlu0 %v2555
    %v2557 = vpop.xlane.xlu0 %2556
    %v2558 = vsel %vm1251, %v2540, 0.0
    %2559 = vadd.xlane.f32.xlu0 %v2558
    %v2560 = vpop.xlane.xlu0 %2559
    %v2561 = vsel %vm1251, %v2541, 0.0
    %2562 = vadd.xlane.f32.xlu0 %v2561
    %v2563 = vpop.xlane.xlu0 %2562
    %v2564 = vsel %vm1251, %v2542, 0.0
    %2565 = vadd.xlane.f32.xlu0 %v2564
    %v2566 = vpop.xlane.xlu0 %2565
    %vm2567 = vcmp.eq.s32.totalorder %v1202, %v1184
    %v2568 = vsel %vm2567, 1, 0
    %v2569 = vcvt.s32.f32 %v2568
    %v2571 = vsel %vm1251, %v2569, 0
    %2573 = vmatprep.subr.mxu0 0.0
    %2574 = vmatpush1.msra.mxu0 %v2545
    %2575 = vmatprep.subr.mxu0 0.0
    %2576 = vmatpush1.msra.mxu0 %v2548
    %2577 = vmatprep.subr.mxu0 0.0
    %2578 = vmatpush1.msra.mxu0 %v2551
    %2579 = vmatprep.subr.mxu0 0.0
    %2580 = vmatpush1.msra.mxu0 %v2554
    %2581 = vmatprep.subr.mxu0 0.0
    %2582 = vmatpush1.msra.mxu0 %v2557
    %2583 = vmatprep.subr.mxu0 0.0
    %2584 = vmatpush1.msra.mxu0 %v2560
    %2585 = vmatprep.subr.mxu0 0.0
    %2586 = vmatpush1.msra.mxu0 %v2563
    %2587 = vmatprep.subr.mxu0 0.0
    %2588 = vmatpush1.msra.mxu0 %v2566
    %2589 = vmatprep.subr.mxu0 0.0
    %2590 = vmatpush1.msra.mxu0 0.0
    %2591 = vmatprep.subr.mxu0 0.0
    %2592 = vmatpush1.msra.mxu0 0.0
    %2593 = vmatprep.subr.mxu0 0.0
    %2594 = vmatpush1.msra.mxu0 0.0
    %2595 = vmatprep.subr.mxu0 0.0
    %2596 = vmatpush1.msra.mxu0 0.0
    %2597 = vmatprep.subr.mxu0 0.0
    %2598 = vmatpush1.msra.mxu0 0.0
    %2599 = vmatprep.subr.mxu0 0.0
    %2600 = vmatpush1.msra.mxu0 0.0
    %2601 = vmatprep.subr.mxu0 0.0
    %2602 = vmatpush1.msra.mxu0 0.0
    %2603 = vmatprep.subr.mxu0 0.0
    %2604 = vmatpush1.msra.mxu0 0.0
    %2605 = vmatprep.subr.mxu0 0.0
    %2606 = vmatpush1.msra.mxu0 0.0
    %2607 = vmatprep.subr.mxu0 0.0
    %2608 = vmatpush1.msra.mxu0 0.0
    %2609 = vmatprep.subr.mxu0 0.0
    %2610 = vmatpush1.msra.mxu0 0.0
    %2611 = vmatprep.subr.mxu0 0.0
    %2612 = vmatpush1.msra.mxu0 0.0
    %2613 = vmatprep.subr.mxu0 0.0
    %2614 = vmatpush1.msra.mxu0 0.0
    %2615 = vmatprep.subr.mxu0 0.0
    %2616 = vmatpush1.msra.mxu0 0.0
    %2617 = vmatprep.subr.mxu0 0.0
    %2618 = vmatpush1.msra.mxu0 0.0
    %2619 = vmatprep.subr.mxu0 0.0
    %2620 = vmatpush1.msra.mxu0 0.0
    %2621 = vmatprep.subr.mxu0 0.0
    %2622 = vmatpush1.msra.mxu0 0.0
    %2623 = vmatprep.subr.mxu0 0.0
    %2624 = vmatpush1.msra.mxu0 0.0
    %2625 = vmatprep.subr.mxu0 0.0
    %2626 = vmatpush1.msra.mxu0 0.0
    %2627 = vmatprep.subr.mxu0 0.0
    %2628 = vmatpush1.msra.mxu0 0.0
    %2629 = vmatprep.subr.mxu0 0.0
    %2630 = vmatpush1.msra.mxu0 0.0
    %2631 = vmatprep.subr.mxu0 0.0
    %2632 = vmatpush1.msra.mxu0 0.0
    %2633 = vmatprep.subr.mxu0 0.0
    %2634 = vmatpush1.msra.mxu0 0.0
    %2635 = vmatprep.subr.mxu0 0.0
    %2636 = vmatpush1.msra.mxu0 0.0
    %2637 = vmatprep.mubr.f32.mxu0 0.0
    %2638 = vmatmul.mubr.f32.gmra.mrb[0].mxu0 %v2571
    %v2639 = vpop.f32.mrb[0].mxu0
    %v2640 = vadd.f32 8.0, %v2639
    %v2641 = vpop.f32.mrb[0].mxu0
    %2642 = vdwg.mxu0
    %v2643 = vmax.f32 %v2640, 0.0
    %v2644 = vrsqrt.pop %v2643
    %v2645 = vmul.f32 %v2643, %v2644
    %vm2646 = vcmp.eq.f32.partialorder %v2643, inf
    %v2647 = vsel %vm2646, %v2643, %v2645
    %vm2648 = vcmp.eq.f32.partialorder %v2643, 0.0
    %v2649 = vand.u32 %v2643, 2147483648
    %v2650 = vsel %vm2648, %v2649, %v2647
    %vm2651 = vcmask 7168
    %v2652 = vsel %vm2651, %v2650, 0.0
    %v2653 = vrot.slane %v2652, 4
    %v2654 = vadd.f32 %v2652, %v2653
    %v2655 = vrot.slane %v2654, 2
    %v2656 = vadd.f32 %v2654, %v2655
    %v2657 = vrot.slane %v2656, 1
    %v2658 = vadd.f32 %v2656, %v2657
    %v2659 = vmul.f32 %v2658, 0.125
    %2660 = vst [vmem:[%s5] sm:$0xff] 0.0
    %2661 = vst.msk [vmem:[%s5] sm:$0xff] %vm1951, %v1963
    %2663 = vrot.lane.b32.xlu0 %v2357, 4
    %v2664 = vpop.permute.xlu0 %2663
    %vm2666 = vcmask 64544
    %2667 = vst.msk [vmem:[%s5] sm:$0xff] %vm2666, %v2664
    %2668 = vrot.lane.b32.xlu0 %v2196, 8
    %v2669 = vpop.permute.xlu0 %2668
    %vm2671 = vcmask 130112
    %2672 = vst.msk [vmem:[%s5] sm:$0xff] %vm2671, %v2669
    %2674 = vrot.lane.b32.xlu0 %v2659, 16
    %v2675 = vpop.permute.xlu0 %2674
    %vm2677 = vcmask 131200
    %2678 = vst.msk [vmem:[%s5] sm:$0x1] %vm2677, %v2675
    // Predicated region
    $region18: #{seal_forward.1} parent=1 // pred_check
      _
    $region19: #{seal_forward.1} parent=1 // pred_check_branch
      %2680 = sbr.rel (0) target = $region21
    $region20: #{seal_forward.1} parent=1 // pred_region
      %s2682 = ssub.s32 128, 128
      %2683 = vsyncadd [#allocation3], %s2682
      %s2685 = sshll.u32 [#allocation2], 4
      %s2686 = int_to_ptr.vmem [resolvable:$true] %s2685
      %2688 = dma.vmem_to_hbm [thread:$0]  %s2686, 128, %s4, [#allocation3]
    $region21: #{seal_forward.1} parent=1 // pred_fallthru
      _
    // Predicated region
    $region22: #{seal_forward.1} parent=1 // pred_check
      _
    $region23: #{seal_forward.1} parent=1 // pred_check_branch
      %2690 = sbr.rel (0) target = $region25
    $region24: #{seal_forward.1} parent=1 // pred_region
      _
    $region25: #{seal_forward.1} parent=1 // pred_fallthru
      _
    // Predicated region
    $region26: #{seal_forward.1} parent=1 // pred_check
      _
    $region27: #{seal_forward.1} parent=1 // pred_check_branch
      %2692 = sbr.rel (0) target = $region29
    $region28: #{seal_forward.1} parent=1 // pred_region
      %2693 = dma.done [#allocation3], 128
    $region29: #{seal_forward.1} parent=1 // pred_fallthru
      _
    // Predicated region
    $region30: #{seal_forward.1} parent=1 // pred_check
      _
    $region31: #{seal_forward.1} parent=1 // pred_check_branch
      %2695 = sbr.rel (0) target = $region33
    $region32: #{seal_forward.1} parent=1 // pred_region
      _
    $region33: #{seal_forward.1} parent=1 // pred_fallthru
      _
    %2696 = vsyncpa [#allocation3], 1

</llo_original>
